<compile_context>
chip_gen: v5e
topology: v5e:2x2
jax: 0.10.0
libtpu: 0.0.40
codegen_flags: <defaults>
</compile_context>

<pallas_src>
import functools

import jax
import jax.numpy as jnp
from jax.experimental import pallas as pl
from jax.experimental.pallas import tpu as pltpu


LANE = 128  # lane width: pad feature dims to multiples of this


def _round_up(v, m):
    return ((v + m - 1) // m) * m


def _pad2(a, rows, cols):
    r, c = a.shape
    return jnp.pad(a, ((0, rows - r), (0, cols - c)))


# ------------------------------ fused kernel ------------------------------- #

def _make_fused_kernel(num_sage, out_valid):
    """Fused forward: num_sage x (SAGE + relu) then GCN + log_softmax.

    Kernel ref order: adj, x, (w_l, w_r, b) * num_sage, w_gcn, b_gcn, out.
    All tensors are whole-array VMEM blocks (single grid point).
    """

    def kernel(*refs):
        adj_ref, x_ref = refs[0], refs[1]
        o_ref = refs[-1]
        p = refs[2:-1]

        adj_f32 = adj_ref[...]                      # [N, N] f32, entries in {0,1}
        adj = adj_f32.astype(jnp.bfloat16)          # MXU operand (exact for 0/1)

        # SAGE mean aggregation = diag(1/deg) @ A; zero-neighbor rows stay zero.
        deg = jnp.sum(adj_f32, axis=1, keepdims=True)             # [N, 1]
        inv_deg = pl.reciprocal(jnp.maximum(deg, 1.0), approx=False)
        # GCN normalization with self loops, applied as row/col scaling
        # (no extra N x N operator materialized):
        #   A_hat @ z = d^-1/2 * (A @ (d^-1/2 * z) + d^-1/2 * z)
        d_inv_sqrt = jax.lax.rsqrt(deg + 1.0)                     # [N, 1]

        h = x_ref[...]                              # bf16 [N, F_pad]

        # --- SAGE layers (+ relu; dropout(training=False) is identity) ---
        for l in range(num_sage):
            w_l, w_r, b = p[3 * l], p[3 * l + 1], p[3 * l + 2]
            agg = jnp.dot(adj, h, preferred_element_type=jnp.float32)
            agg = (agg * inv_deg).astype(jnp.bfloat16)
            t = jnp.dot(agg, w_l[...], preferred_element_type=jnp.float32)
            t = t + jnp.dot(h, w_r[...], preferred_element_type=jnp.float32)
            t = t + b[...]
            h = jnp.maximum(t, 0.0).astype(jnp.bfloat16)

        # --- final GCN layer + log_softmax ---
        w_g, b_g = p[3 * num_sage], p[3 * num_sage + 1]
        z = jnp.dot(h, w_g[...], preferred_element_type=jnp.float32)   # [N, C_pad]
        zs = (z * d_inv_sqrt).astype(jnp.bfloat16)
        prop = jnp.dot(adj, zs, preferred_element_type=jnp.float32)
        prop = prop + zs.astype(jnp.float32)        # self-loop term
        logits = prop * d_inv_sqrt + b_g[...]

        # Mask the lane-padding classes, then stable log_softmax over valid ones.
        col = jax.lax.broadcasted_iota(jnp.int32, logits.shape, 1)
        logits = jnp.where(col < out_valid, logits, -1e30)
        m = jnp.max(logits, axis=-1, keepdims=True)
        zc = logits - m
        lse = jnp.log(jnp.sum(jnp.exp(zc), axis=-1, keepdims=True))
        o_ref[...] = zc - lse

    return kernel


# --------------------------------- model ----------------------------------- #

def gnn_forward(params, x, adj):
    """adj: dense [N, N] f32 with adj[target, source] = 1 (no self loops)."""
    n = adj.shape[0]
    in_dim = x.shape[1]
    sage = params["sage"]
    w_gcn, b_gcn = params["gcn"]
    out_dim = w_gcn.shape[1]

    in_pad = _round_up(in_dim, LANE)
    out_pad = _round_up(out_dim, LANE)

    # Lane-dense padded operands: bf16 matmul inputs, f32 biases, f32 adjacency
    # (so in-kernel degree sums are exact).
    operands = [adj.astype(jnp.float32),
                _pad2(x, n, in_pad).astype(jnp.bfloat16)]
    for (w_l, w_r, b) in sage:
        rp = _round_up(w_l.shape[0], LANE)
        cp = _round_up(w_l.shape[1], LANE)
        operands += [_pad2(w_l, rp, cp).astype(jnp.bfloat16),
                     _pad2(w_r, rp, cp).astype(jnp.bfloat16),
                     _pad2(b, 1, cp).astype(jnp.float32)]
    rp = _round_up(w_gcn.shape[0], LANE)
    operands += [_pad2(w_gcn, rp, out_pad).astype(jnp.bfloat16),
                 _pad2(b_gcn, 1, out_pad).astype(jnp.float32)]

    kernel = _make_fused_kernel(len(sage), out_dim)
    vmem = pl.BlockSpec(memory_space=pltpu.MemorySpace.VMEM)
    out_padded = pl.pallas_call(
        kernel,
        out_shape=jax.ShapeDtypeStruct((n, out_pad), jnp.float32),
        in_specs=[vmem] * len(operands),
        out_specs=vmem,
    )(*operands)
    return out_padded[:, :out_dim]


def gnn_forward_ref(params, x, adj):
    """Pure-JAX reference mirroring the kernel's bf16-operand / f32-accum math."""
    bf16 = jnp.bfloat16
    deg = jnp.sum(adj, axis=1, keepdims=True)
    inv_deg = 1.0 / jnp.maximum(deg, 1.0)
    d_inv_sqrt = jax.lax.rsqrt(deg + 1.0)
    a = adj.astype(bf16)
    h = x.astype(bf16)
    for (w_l, w_r, b) in params["sage"]:
        agg = (jnp.dot(a, h, preferred_element_type=jnp.float32) * inv_deg).astype(bf16)
        t = jnp.dot(agg, w_l.astype(bf16), preferred_element_type=jnp.float32)
        t = t + jnp.dot(h, w_r.astype(bf16), preferred_element_type=jnp.float32)
        t = t + b
        h = jnp.maximum(t, 0.0).astype(bf16)
    w, b = params["gcn"]
    z = jnp.dot(h, w.astype(bf16), preferred_element_type=jnp.float32)
    zs = (z * d_inv_sqrt).astype(bf16)
    prop = jnp.dot(a, zs, preferred_element_type=jnp.float32) + zs.astype(jnp.float32)
    logits = prop * d_inv_sqrt + b
    return jax.nn.log_softmax(logits, axis=1)


def init_params(key, in_channels, hidden_channels, out_channels, num_layers):
    dims = [in_channels] + [hidden_channels] * (num_layers - 1)
    sage = []
    for i in range(num_layers - 1):
        f_in, f_out = dims[i], dims[i + 1]
        key, k1, k2 = jax.random.split(key, 3)
        scale = 1.0 / jnp.sqrt(jnp.float32(f_in))
        w_l = jax.random.normal(k1, (f_in, f_out), jnp.float32) * scale
        w_r = jax.random.normal(k2, (f_in, f_out), jnp.float32) * scale
        b = jnp.zeros((1, f_out), jnp.float32)
        sage.append((w_l, w_r, b))
    key, k3 = jax.random.split(key)
    scale = 1.0 / jnp.sqrt(jnp.float32(hidden_channels))
    w = jax.random.normal(k3, (hidden_channels, out_channels), jnp.float32) * scale
    b = jnp.zeros((1, out_channels), jnp.float32)
    return {"sage": sage, "gcn": (w, b)}


# ---------------------------------- main ------------------------------------ #

if __name__ == "__main__":
    key = jax.random.PRNGKey(0)

    N = 128           # number of nodes (small synthetic "Cora")
    IN = 64           # input feature channels
    HID = 64          # hidden_channels
    OUT = 8           # output classes
    NUM_LAYERS = 3
    E = 512           # directed edges before symmetrization

    key, kx, ks, kd, kp = jax.random.split(key, 5)

    # Synthetic node features.
    x = jax.random.normal(kx, (N, IN), jnp.float32)

    # Synthetic undirected edge_index -> dense adjacency (no self loops).
    src = jax.random.randint(ks, (E,), 0, N)
    dst = jax.random.randint(kd, (E,), 0, N)
    adj = jnp.zeros((N, N), jnp.float32).at[dst, src].set(1.0)
    adj = jnp.clip(adj + adj.T, 0.0, 1.0)               # symmetrize
    adj = adj * (1.0 - jnp.eye(N, dtype=jnp.float32))   # drop self loops

    params = init_params(kp, IN, HID, OUT, NUM_LAYERS)

    out = gnn_forward(params, x, adj)
    out = jax.block_until_ready(out)

    ref = gnn_forward_ref(params, x, adj)
    assert out.shape == (N, OUT)
    assert jnp.allclose(out, ref, atol=2e-2, rtol=2e-2), "mismatch vs JAX reference"

    print("KERNEL_OK")
</pallas_src>

<mosaic_0001>
module attributes {stable_mosaic.version = 11 : i64} {
  func.func @kernel(%arg0: memref<128x128xf32, #tpu.memory_space<vmem>>, %arg1: memref<128x128xbf16, #tpu.memory_space<vmem>>, %arg2: memref<128x128xbf16, #tpu.memory_space<vmem>>, %arg3: memref<128x128xbf16, #tpu.memory_space<vmem>>, %arg4: memref<1x128xf32, #tpu.memory_space<vmem>>, %arg5: memref<128x128xbf16, #tpu.memory_space<vmem>>, %arg6: memref<128x128xbf16, #tpu.memory_space<vmem>>, %arg7: memref<1x128xf32, #tpu.memory_space<vmem>>, %arg8: memref<128x128xbf16, #tpu.memory_space<vmem>>, %arg9: memref<1x128xf32, #tpu.memory_space<vmem>>, %arg10: memref<128x128xf32, #tpu.memory_space<vmem>>) attributes {dimension_semantics = [], scalar_prefetch = 0 : i64, scratch_operands = 0 : i64, tpu.core_type = #tpu.core_type<tc>} {
    %c0 = arith.constant 0 : index
    %c0_0 = arith.constant 0 : index
    %0 = vector.load %arg0[%c0, %c0_0] : memref<128x128xf32, #tpu.memory_space<vmem>>, vector<128x128xf32>
    %1 = arith.truncf %0 : vector<128x128xf32> to vector<128x128xbf16>
    %cst = arith.constant dense<0.000000e+00> : vector<128xf32>
    %2 = vector.multi_reduction <add>, %0, %cst [1] : vector<128x128xf32> to vector<128xf32>
    %3 = vector.shape_cast %2 : vector<128xf32> to vector<128x1xf32>
    %cst_1 = arith.constant 1.000000e+00 : f32
    %4 = vector.broadcast %cst_1 : f32 to vector<128x1xf32>
    %5 = arith.maximumf %3, %4 : vector<128x1xf32>
    %6 = tpu.reciprocal %5 : vector<128x1xf32> -> vector<128x1xf32>
    %cst_2 = arith.constant 1.000000e+00 : f32
    %7 = vector.broadcast %cst_2 : f32 to vector<128x1xf32>
    %8 = arith.addf %3, %7 : vector<128x1xf32>
    %9 = math.rsqrt %8 : vector<128x1xf32>
    %c0_3 = arith.constant 0 : index
    %c0_4 = arith.constant 0 : index
    %10 = vector.load %arg1[%c0_3, %c0_4] : memref<128x128xbf16, #tpu.memory_space<vmem>>, vector<128x128xbf16>
    %cst_5 = arith.constant dense<0.000000e+00> : vector<128x128xf32>
    %11 = tpu.matmul %1, %10, %cst_5 {dimension_numbers = #tpu.dot_dimension_numbers<[1], [0], [0], [1], [0, 0, 1, 1], [], []>} : vector<128x128xbf16>, vector<128x128xbf16>, vector<128x128xf32> -> vector<128x128xf32>
    %12 = vector.broadcast %6 : vector<128x1xf32> to vector<128x128xf32>
    %13 = arith.mulf %11, %12 : vector<128x128xf32>
    %14 = arith.truncf %13 : vector<128x128xf32> to vector<128x128xbf16>
    %c0_6 = arith.constant 0 : index
    %c0_7 = arith.constant 0 : index
    %15 = vector.load %arg2[%c0_6, %c0_7] : memref<128x128xbf16, #tpu.memory_space<vmem>>, vector<128x128xbf16>
    %cst_8 = arith.constant dense<0.000000e+00> : vector<128x128xf32>
    %16 = tpu.matmul %14, %15, %cst_8 {dimension_numbers = #tpu.dot_dimension_numbers<[1], [0], [0], [1], [0, 0, 1, 1], [], []>} : vector<128x128xbf16>, vector<128x128xbf16>, vector<128x128xf32> -> vector<128x128xf32>
    %c0_9 = arith.constant 0 : index
    %c0_10 = arith.constant 0 : index
    %17 = vector.load %arg3[%c0_9, %c0_10] : memref<128x128xbf16, #tpu.memory_space<vmem>>, vector<128x128xbf16>
    %cst_11 = arith.constant dense<0.000000e+00> : vector<128x128xf32>
    %18 = tpu.matmul %10, %17, %cst_11 {dimension_numbers = #tpu.dot_dimension_numbers<[1], [0], [0], [1], [0, 0, 1, 1], [], []>} : vector<128x128xbf16>, vector<128x128xbf16>, vector<128x128xf32> -> vector<128x128xf32>
    %19 = arith.addf %16, %18 : vector<128x128xf32>
    %c0_12 = arith.constant 0 : index
    %c0_13 = arith.constant 0 : index
    %20 = vector.load %arg4[%c0_12, %c0_13] : memref<1x128xf32, #tpu.memory_space<vmem>>, vector<1x128xf32>
    %21 = vector.broadcast %20 : vector<1x128xf32> to vector<128x128xf32>
    %22 = arith.addf %19, %21 : vector<128x128xf32>
    %cst_14 = arith.constant 0.000000e+00 : f32
    %23 = vector.broadcast %cst_14 : f32 to vector<128x128xf32>
    %24 = arith.maximumf %22, %23 : vector<128x128xf32>
    %25 = arith.truncf %24 : vector<128x128xf32> to vector<128x128xbf16>
    %cst_15 = arith.constant dense<0.000000e+00> : vector<128x128xf32>
    %26 = tpu.matmul %1, %25, %cst_15 {dimension_numbers = #tpu.dot_dimension_numbers<[1], [0], [0], [1], [0, 0, 1, 1], [], []>} : vector<128x128xbf16>, vector<128x128xbf16>, vector<128x128xf32> -> vector<128x128xf32>
    %27 = vector.broadcast %6 : vector<128x1xf32> to vector<128x128xf32>
    %28 = arith.mulf %26, %27 : vector<128x128xf32>
    %29 = arith.truncf %28 : vector<128x128xf32> to vector<128x128xbf16>
    %c0_16 = arith.constant 0 : index
    %c0_17 = arith.constant 0 : index
    %30 = vector.load %arg5[%c0_16, %c0_17] : memref<128x128xbf16, #tpu.memory_space<vmem>>, vector<128x128xbf16>
    %cst_18 = arith.constant dense<0.000000e+00> : vector<128x128xf32>
    %31 = tpu.matmul %29, %30, %cst_18 {dimension_numbers = #tpu.dot_dimension_numbers<[1], [0], [0], [1], [0, 0, 1, 1], [], []>} : vector<128x128xbf16>, vector<128x128xbf16>, vector<128x128xf32> -> vector<128x128xf32>
    %c0_19 = arith.constant 0 : index
    %c0_20 = arith.constant 0 : index
    %32 = vector.load %arg6[%c0_19, %c0_20] : memref<128x128xbf16, #tpu.memory_space<vmem>>, vector<128x128xbf16>
    %cst_21 = arith.constant dense<0.000000e+00> : vector<128x128xf32>
    %33 = tpu.matmul %25, %32, %cst_21 {dimension_numbers = #tpu.dot_dimension_numbers<[1], [0], [0], [1], [0, 0, 1, 1], [], []>} : vector<128x128xbf16>, vector<128x128xbf16>, vector<128x128xf32> -> vector<128x128xf32>
    %34 = arith.addf %31, %33 : vector<128x128xf32>
    %c0_22 = arith.constant 0 : index
    %c0_23 = arith.constant 0 : index
    %35 = vector.load %arg7[%c0_22, %c0_23] : memref<1x128xf32, #tpu.memory_space<vmem>>, vector<1x128xf32>
    %36 = vector.broadcast %35 : vector<1x128xf32> to vector<128x128xf32>
    %37 = arith.addf %34, %36 : vector<128x128xf32>
    %cst_24 = arith.constant 0.000000e+00 : f32
    %38 = vector.broadcast %cst_24 : f32 to vector<128x128xf32>
    %39 = arith.maximumf %37, %38 : vector<128x128xf32>
    %40 = arith.truncf %39 : vector<128x128xf32> to vector<128x128xbf16>
    %c0_25 = arith.constant 0 : index
    %c0_26 = arith.constant 0 : index
    %41 = vector.load %arg8[%c0_25, %c0_26] : memref<128x128xbf16, #tpu.memory_space<vmem>>, vector<128x128xbf16>
    %cst_27 = arith.constant dense<0.000000e+00> : vector<128x128xf32>
    %42 = tpu.matmul %40, %41, %cst_27 {dimension_numbers = #tpu.dot_dimension_numbers<[1], [0], [0], [1], [0, 0, 1, 1], [], []>} : vector<128x128xbf16>, vector<128x128xbf16>, vector<128x128xf32> -> vector<128x128xf32>
    %43 = vector.broadcast %9 : vector<128x1xf32> to vector<128x128xf32>
    %44 = arith.mulf %42, %43 : vector<128x128xf32>
    %45 = arith.truncf %44 : vector<128x128xf32> to vector<128x128xbf16>
    %cst_28 = arith.constant dense<0.000000e+00> : vector<128x128xf32>
    %46 = tpu.matmul %1, %45, %cst_28 {dimension_numbers = #tpu.dot_dimension_numbers<[1], [0], [0], [1], [0, 0, 1, 1], [], []>} : vector<128x128xbf16>, vector<128x128xbf16>, vector<128x128xf32> -> vector<128x128xf32>
    %47 = arith.extf %45 : vector<128x128xbf16> to vector<128x128xf32>
    %48 = arith.addf %46, %47 : vector<128x128xf32>
    %49 = vector.broadcast %9 : vector<128x1xf32> to vector<128x128xf32>
    %50 = arith.mulf %48, %49 : vector<128x128xf32>
    %c0_29 = arith.constant 0 : index
    %c0_30 = arith.constant 0 : index
    %51 = vector.load %arg9[%c0_29, %c0_30] : memref<1x128xf32, #tpu.memory_space<vmem>>, vector<1x128xf32>
    %52 = vector.broadcast %51 : vector<1x128xf32> to vector<128x128xf32>
    %53 = arith.addf %50, %52 : vector<128x128xf32>
    %54 = tpu.iota {dimensions = array<i32: 1>} : vector<128x128xi32>
    %c8_i32 = arith.constant 8 : i32
    %55 = vector.broadcast %c8_i32 : i32 to vector<128x128xi32>
    %56 = arith.cmpi slt, %54, %55 : vector<128x128xi32>
    %cst_31 = arith.constant -1.000000e+30 : f32
    %57 = vector.broadcast %cst_31 : f32 to vector<128x128xf32>
    %58 = arith.select %56, %53, %57 : vector<128x128xi1>, vector<128x128xf32>
    %cst_32 = arith.constant dense<0xFF800000> : vector<128xf32>
    %59 = vector.multi_reduction <maximumf>, %58, %cst_32 [1] : vector<128x128xf32> to vector<128xf32>
    %60 = vector.shape_cast %59 : vector<128xf32> to vector<128x1xf32>
    %61 = vector.broadcast %60 : vector<128x1xf32> to vector<128x128xf32>
    %62 = arith.subf %58, %61 : vector<128x128xf32>
    %63 = math.exp %62 : vector<128x128xf32>
    %cst_33 = arith.constant dense<0.000000e+00> : vector<128xf32>
    %64 = vector.multi_reduction <add>, %63, %cst_33 [1] : vector<128x128xf32> to vector<128xf32>
    %65 = vector.shape_cast %64 : vector<128xf32> to vector<128x1xf32>
    %66 = math.log %65 : vector<128x1xf32>
    %67 = vector.broadcast %66 : vector<128x1xf32> to vector<128x128xf32>
    %68 = arith.subf %62, %67 : vector<128x128xf32>
    %c0_34 = arith.constant 0 : index
    %c0_35 = arith.constant 0 : index
    %69 = vector.load %arg10[%c0_34, %c0_35] : memref<128x128xf32, #tpu.memory_space<vmem>>, vector<128x128xf32>
    tpu.vector_store %arg10[%c0_34, %c0_35], %68 {strides = array<i32>} : memref<128x128xf32, #tpu.memory_space<vmem>>, vector<128x128xf32>,
    return
  }
}

</mosaic_0001>

<llo_original>
// kernel: tpu_custom_call.1
$region0: #{tpu_custom_call.1}
  #allocation0 [shape = 'u32[]', space=smem, size = 0x4, offset = 0x4, fixed_abs, tag = 'smem constant byte address 0x4 - core index']
  #allocation1 [shape = 'u32[72,128]{1,0:T(1,128)}', space=vmem, size = 0x9000, scoped, tag = 'internal scratch']
  %s0 = inlined_call_operand.hbm [shape: f32[128,128], index: 0, kind: input, shape index: {}]
  %s1 = inlined_call_operand.hbm [shape: bf16[128,128], index: 1, kind: input, shape index: {}]
  %s2 = inlined_call_operand.hbm [shape: bf16[128,128], index: 2, kind: input, shape index: {}]
  %s3 = inlined_call_operand.hbm [shape: bf16[128,128], index: 3, kind: input, shape index: {}]
  %s4 = inlined_call_operand.vmem [shape: f32[1,128], index: 4, kind: input, shape index: {}]
  %s5 = inlined_call_operand.hbm [shape: bf16[128,128], index: 5, kind: input, shape index: {}]
  %s6 = inlined_call_operand.hbm [shape: bf16[128,128], index: 6, kind: input, shape index: {}]
  %s7 = inlined_call_operand.vmem [shape: f32[1,128], index: 7, kind: input, shape index: {}]
  %s8 = inlined_call_operand.hbm [shape: bf16[128,128], index: 8, kind: input, shape index: {}]
  %s9 = inlined_call_operand.vmem [shape: f32[1,128], index: 9, kind: input, shape index: {}]
  %s10 = inlined_call_operand.hbm [shape: f32[128,128], index: 10, kind: output, shape index: {}]
  %s11 = sld [smem:[#allocation0]]
  $region78: #{tpu_custom_call.1} parent=0
    _
  %s13 = ssub.s32 1, %s11
  %s14 = scalar_select 0, %s13, %s11
  $region1: #{tpu_custom_call.1} parent=0
    #allocation2 [shape = 'u8[65536]{0}', space=vmem, size = 0x10000, scoped, tag = 'input window, operand 0, single buffered']
    #allocation3 [shape = 's32[1]{0}', space=sflag, size = 0x4, scoped, tag = 'scoped memory for tpu_custom_call.1']
    #allocation4 [shape = 's32[1]{0}', space=sflag, size = 0x4, scoped, tag = 'scoped memory for tpu_custom_call.1']
    #allocation5 [shape = 'u8[32768]{0}', space=vmem, size = 0x8000, scoped, tag = 'input window, operand 1, single buffered']
    #allocation6 [shape = 's32[1]{0}', space=sflag, size = 0x4, scoped, tag = 'scoped memory for tpu_custom_call.1']
    #allocation7 [shape = 'u8[32768]{0}', space=vmem, size = 0x8000, scoped, tag = 'input window, operand 2, single buffered']
    #allocation8 [shape = 'u8[32768]{0}', space=vmem, size = 0x8000, scoped, tag = 'input window, operand 3, single buffered']
    #allocation9 [shape = 's32[1]{0}', space=sflag, size = 0x4, scoped, tag = 'scoped memory for tpu_custom_call.1']
    #allocation10 [shape = 'u8[32768]{0}', space=vmem, size = 0x8000, scoped, tag = 'input window, operand 5, single buffered']
    #allocation11 [shape = 'u8[32768]{0}', space=vmem, size = 0x8000, scoped, tag = 'input window, operand 6, single buffered']
    #allocation12 [shape = 's32[1]{0}', space=sflag, size = 0x4, scoped, tag = 'scoped memory for tpu_custom_call.1']
    #allocation13 [shape = 'u8[32768]{0}', space=vmem, size = 0x8000, scoped, tag = 'input window, operand 8, single buffered']
    #allocation14 [shape = 'u8[65536]{0}', space=vmem, size = 0x10000, scoped, tag = 'output window, operand 0, single buffered']
    %15 = vsyncpa [#allocation3], 0
    %16 = vsyncpa [#allocation6], 0
    %17 = vsyncpa [#allocation9], 0
    %18 = vsyncpa [#allocation12], 0
    %19 = vsyncpa [#allocation4], 0
    // Predicated region
    $region2: #{tpu_custom_call.1} parent=1 // pred_check
      _
    $region3: #{tpu_custom_call.1} parent=1 // pred_check_branch
      %21 = sbr.rel (0) target = $region5
    $region4: #{tpu_custom_call.1} parent=1 // pred_region
      %23 = vsyncadd [#allocation3], 0
      %s24 = sshll.u32 %s0, 4
      %s25 = int_to_ptr.hbm [resolvable:$true] %s24
      %s26 = sshll.u32 [#allocation2], 4
      %s27 = int_to_ptr.vmem [resolvable:$true] %s26
      %32 = dma.hbm_to_vmem [thread:$0]  %s25, 2048, %s27, [#allocation3], 128, 128, 8
    $region5: #{tpu_custom_call.1} parent=1 // pred_fallthru
      _
    // Predicated region
    $region6: #{tpu_custom_call.1} parent=1 // pred_check
      _
    $region7: #{tpu_custom_call.1} parent=1 // pred_check_branch
      %34 = sbr.rel (0) target = $region9
    $region8: #{tpu_custom_call.1} parent=1 // pred_region
      %36 = vsyncadd [#allocation6], 0
      %s37 = sshll.u32 %s1, 4
      %s38 = int_to_ptr.hbm [resolvable:$true] %s37
      %s39 = sshll.u32 [#allocation5], 4
      %s40 = int_to_ptr.vmem [resolvable:$true] %s39
      %45 = dma.hbm_to_vmem [thread:$0]  %s38, 1024, %s40, [#allocation6], 64, 64, 4
    $region9: #{tpu_custom_call.1} parent=1 // pred_fallthru
      _
    // Predicated region
    $region10: #{tpu_custom_call.1} parent=1 // pred_check
      _
    $region11: #{tpu_custom_call.1} parent=1 // pred_check_branch
      %47 = sbr.rel (0) target = $region13
    $region12: #{tpu_custom_call.1} parent=1 // pred_region
      %49 = vsyncadd [#allocation6], 0
      %s50 = sshll.u32 %s2, 4
      %s51 = int_to_ptr.hbm [resolvable:$true] %s50
      %s52 = sshll.u32 [#allocation7], 4
      %s53 = int_to_ptr.vmem [resolvable:$true] %s52
      %58 = dma.hbm_to_vmem [thread:$0]  %s51, 1024, %s53, [#allocation6], 64, 64, 4
    $region13: #{tpu_custom_call.1} parent=1 // pred_fallthru
      _
    // Predicated region
    $region14: #{tpu_custom_call.1} parent=1 // pred_check
      _
    $region15: #{tpu_custom_call.1} parent=1 // pred_check_branch
      %60 = sbr.rel (0) target = $region17
    $region16: #{tpu_custom_call.1} parent=1 // pred_region
      %62 = vsyncadd [#allocation9], 0
      %s63 = sshll.u32 %s3, 4
      %s64 = int_to_ptr.hbm [resolvable:$true] %s63
      %s65 = sshll.u32 [#allocation8], 4
      %s66 = int_to_ptr.vmem [resolvable:$true] %s65
      %71 = dma.hbm_to_vmem [thread:$0]  %s64, 1024, %s66, [#allocation9], 64, 64, 4
    $region17: #{tpu_custom_call.1} parent=1 // pred_fallthru
      _
    // Predicated region
    $region18: #{tpu_custom_call.1} parent=1 // pred_check
      _
    $region19: #{tpu_custom_call.1} parent=1 // pred_check_branch
      %73 = sbr.rel (0) target = $region21
    $region20: #{tpu_custom_call.1} parent=1 // pred_region
      _
    $region21: #{tpu_custom_call.1} parent=1 // pred_fallthru
      _
    // Predicated region
    $region22: #{tpu_custom_call.1} parent=1 // pred_check
      _
    $region23: #{tpu_custom_call.1} parent=1 // pred_check_branch
      %75 = sbr.rel (0) target = $region25
    $region24: #{tpu_custom_call.1} parent=1 // pred_region
      %77 = vsyncadd [#allocation9], 0
      %s78 = sshll.u32 %s5, 4
      %s79 = int_to_ptr.hbm [resolvable:$true] %s78
      %s80 = sshll.u32 [#allocation10], 4
      %s81 = int_to_ptr.vmem [resolvable:$true] %s80
      %86 = dma.hbm_to_vmem [thread:$0]  %s79, 1024, %s81, [#allocation9], 64, 64, 4
    $region25: #{tpu_custom_call.1} parent=1 // pred_fallthru
      _
    // Predicated region
    $region26: #{tpu_custom_call.1} parent=1 // pred_check
      _
    $region27: #{tpu_custom_call.1} parent=1 // pred_check_branch
      %88 = sbr.rel (0) target = $region29
    $region28: #{tpu_custom_call.1} parent=1 // pred_region
      %90 = vsyncadd [#allocation12], 0
      %s91 = sshll.u32 %s6, 4
      %s92 = int_to_ptr.hbm [resolvable:$true] %s91
      %s93 = sshll.u32 [#allocation11], 4
      %s94 = int_to_ptr.vmem [resolvable:$true] %s93
      %99 = dma.hbm_to_vmem [thread:$0]  %s92, 1024, %s94, [#allocation12], 64, 64, 4
    $region29: #{tpu_custom_call.1} parent=1 // pred_fallthru
      _
    // Predicated region
    $region30: #{tpu_custom_call.1} parent=1 // pred_check
      _
    $region31: #{tpu_custom_call.1} parent=1 // pred_check_branch
      %101 = sbr.rel (0) target = $region33
    $region32: #{tpu_custom_call.1} parent=1 // pred_region
      _
    $region33: #{tpu_custom_call.1} parent=1 // pred_fallthru
      _
    // Predicated region
    $region34: #{tpu_custom_call.1} parent=1 // pred_check
      _
    $region35: #{tpu_custom_call.1} parent=1 // pred_check_branch
      %103 = sbr.rel (0) target = $region37
    $region36: #{tpu_custom_call.1} parent=1 // pred_region
      %105 = vsyncadd [#allocation12], 0
      %s106 = sshll.u32 %s8, 4
      %s107 = int_to_ptr.hbm [resolvable:$true] %s106
      %s108 = sshll.u32 [#allocation13], 4
      %s109 = int_to_ptr.vmem [resolvable:$true] %s108
      %114 = dma.hbm_to_vmem [thread:$0]  %s107, 1024, %s109, [#allocation12], 64, 64, 4
    $region37: #{tpu_custom_call.1} parent=1 // pred_fallthru
      _
    // Predicated region
    $region38: #{tpu_custom_call.1} parent=1 // pred_check
      _
    $region39: #{tpu_custom_call.1} parent=1 // pred_check_branch
      %116 = sbr.rel (0) target = $region41
    $region40: #{tpu_custom_call.1} parent=1 // pred_region
      _
    $region41: #{tpu_custom_call.1} parent=1 // pred_fallthru
      _
    // Predicated region
    $region42: #{tpu_custom_call.1} parent=1 // pred_check
      _
    $region43: #{tpu_custom_call.1} parent=1 // pred_check_branch
      %118 = sbr.rel (0) target = $region45
    $region44: #{tpu_custom_call.1} parent=1 // pred_region
      %120 = dma.done [#allocation3], 2048
    $region45: #{tpu_custom_call.1} parent=1 // pred_fallthru
      _
    // Predicated region
    $region46: #{tpu_custom_call.1} parent=1 // pred_check
      _
    $region47: #{tpu_custom_call.1} parent=1 // pred_check_branch
      %122 = sbr.rel (0) target = $region49
    $region48: #{tpu_custom_call.1} parent=1 // pred_region
      %124 = dma.done [#allocation6], 1024
    $region49: #{tpu_custom_call.1} parent=1 // pred_fallthru
      _
    // Predicated region
    $region50: #{tpu_custom_call.1} parent=1 // pred_check
      _
    $region51: #{tpu_custom_call.1} parent=1 // pred_check_branch
      %126 = sbr.rel (0) target = $region53
    $region52: #{tpu_custom_call.1} parent=1 // pred_region
      %128 = dma.done [#allocation6], 1024
    $region53: #{tpu_custom_call.1} parent=1 // pred_fallthru
      _
    // Predicated region
    $region54: #{tpu_custom_call.1} parent=1 // pred_check
      _
    $region55: #{tpu_custom_call.1} parent=1 // pred_check_branch
      %130 = sbr.rel (0) target = $region57
    $region56: #{tpu_custom_call.1} parent=1 // pred_region
      %132 = dma.done [#allocation9], 1024
    $region57: #{tpu_custom_call.1} parent=1 // pred_fallthru
      _
    // Predicated region
    $region58: #{tpu_custom_call.1} parent=1 // pred_check
      _
    $region59: #{tpu_custom_call.1} parent=1 // pred_check_branch
      %134 = sbr.rel (0) target = $region61
    $region60: #{tpu_custom_call.1} parent=1 // pred_region
      %136 = dma.done [#allocation9], 1024
    $region61: #{tpu_custom_call.1} parent=1 // pred_fallthru
      _
    // Predicated region
    $region62: #{tpu_custom_call.1} parent=1 // pred_check
      _
    $region63: #{tpu_custom_call.1} parent=1 // pred_check_branch
      %138 = sbr.rel (0) target = $region65
    $region64: #{tpu_custom_call.1} parent=1 // pred_region
      %140 = dma.done [#allocation12], 1024
    $region65: #{tpu_custom_call.1} parent=1 // pred_fallthru
      _
    // Predicated region
    $region66: #{tpu_custom_call.1} parent=1 // pred_check
      _
    $region67: #{tpu_custom_call.1} parent=1 // pred_check_branch
      %142 = sbr.rel (0) target = $region69
    $region68: #{tpu_custom_call.1} parent=1 // pred_region
      %144 = dma.done [#allocation12], 1024
    $region69: #{tpu_custom_call.1} parent=1 // pred_fallthru
      _
    %v145 = vld [vmem:[#allocation2] sm:$0xff]
    %v146 = vld [vmem:[#allocation2 + $0x8] sm:$0xff]
    %v147 = vld [vmem:[#allocation2 + $0x10] sm:$0xff]
    %v148 = vld [vmem:[#allocation2 + $0x18] sm:$0xff]
    %v149 = vld [vmem:[#allocation2 + $0x20] sm:$0xff]
    %v150 = vld [vmem:[#allocation2 + $0x28] sm:$0xff]
    %v151 = vld [vmem:[#allocation2 + $0x30] sm:$0xff]
    %v152 = vld [vmem:[#allocation2 + $0x38] sm:$0xff]
    %v153 = vld [vmem:[#allocation2 + $0x40] sm:$0xff]
    %v154 = vld [vmem:[#allocation2 + $0x48] sm:$0xff]
    %v155 = vld [vmem:[#allocation2 + $0x50] sm:$0xff]
    %v156 = vld [vmem:[#allocation2 + $0x58] sm:$0xff]
    %v157 = vld [vmem:[#allocation2 + $0x60] sm:$0xff]
    %v158 = vld [vmem:[#allocation2 + $0x68] sm:$0xff]
    %v159 = vld [vmem:[#allocation2 + $0x70] sm:$0xff]
    %v160 = vld [vmem:[#allocation2 + $0x78] sm:$0xff]
    %v161 = vpack.c.bf16 %v146, %v145
    %v162 = vpack.c.bf16 %v148, %v147
    %v163 = vpack.c.bf16 %v150, %v149
    %v164 = vpack.c.bf16 %v152, %v151
    %v165 = vpack.c.bf16 %v154, %v153
    %v166 = vpack.c.bf16 %v156, %v155
    %v167 = vpack.c.bf16 %v158, %v157
    %v168 = vpack.c.bf16 %v160, %v159
    %169 = vadd.xlane.f32.xlu0 %v145
    %v170 = vpop.xlane.xlu0 %169
    %171 = vadd.xlane.f32.xlu0 %v146
    %v172 = vpop.xlane.xlu0 %171
    %173 = vadd.xlane.f32.xlu0 %v147
    %v174 = vpop.xlane.xlu0 %173
    %175 = vadd.xlane.f32.xlu0 %v148
    %v176 = vpop.xlane.xlu0 %175
    %177 = vadd.xlane.f32.xlu0 %v149
    %v178 = vpop.xlane.xlu0 %177
    %179 = vadd.xlane.f32.xlu0 %v150
    %v180 = vpop.xlane.xlu0 %179
    %181 = vadd.xlane.f32.xlu0 %v151
    %v182 = vpop.xlane.xlu0 %181
    %183 = vadd.xlane.f32.xlu0 %v152
    %v184 = vpop.xlane.xlu0 %183
    %185 = vadd.xlane.f32.xlu0 %v153
    %v186 = vpop.xlane.xlu0 %185
    %187 = vadd.xlane.f32.xlu0 %v154
    %v188 = vpop.xlane.xlu0 %187
    %189 = vadd.xlane.f32.xlu0 %v155
    %v190 = vpop.xlane.xlu0 %189
    %191 = vadd.xlane.f32.xlu0 %v156
    %v192 = vpop.xlane.xlu0 %191
    %193 = vadd.xlane.f32.xlu0 %v157
    %v194 = vpop.xlane.xlu0 %193
    %195 = vadd.xlane.f32.xlu0 %v158
    %v196 = vpop.xlane.xlu0 %195
    %197 = vadd.xlane.f32.xlu0 %v159
    %v198 = vpop.xlane.xlu0 %197
    %199 = vadd.xlane.f32.xlu0 %v160
    %v200 = vpop.xlane.xlu0 %199
    %v201 = vmax.f32 %v170, 1.0
    %v202 = vmax.f32 %v172, 1.0
    %v203 = vmax.f32 %v174, 1.0
    %v204 = vmax.f32 %v176, 1.0
    %v205 = vmax.f32 %v178, 1.0
    %v206 = vmax.f32 %v180, 1.0
    %v207 = vmax.f32 %v182, 1.0
    %v208 = vmax.f32 %v184, 1.0
    %v209 = vmax.f32 %v186, 1.0
    %v210 = vmax.f32 %v188, 1.0
    %v211 = vmax.f32 %v190, 1.0
    %v212 = vmax.f32 %v192, 1.0
    %v213 = vmax.f32 %v194, 1.0
    %v214 = vmax.f32 %v196, 1.0
    %v215 = vmax.f32 %v198, 1.0
    %v216 = vmax.f32 %v200, 1.0
    %v217 = vrcp.pop %v201
    %v218 = vmul.f32 %v201, %v217
    %v219 = vsub.f32 1.0, %v218
    %v220 = vmul.f32 %v217, %v219
    %v221 = vadd.f32 %v217, %v220
    %vm222 = vweird.f32 %v201
    %vm223 = vweird.f32 %v217
    %vm224 = vmor %vm222, %vm223
    %v225 = vsel %vm224, %v217, %v221
    %v226 = vand.u32 2147483647, %v201
    %vm227 = vcmp.eq.f32.partialorder %v226, 8.507059e+37
    %v228 = vand.u32 %v201, 2147483648
    %v229 = vor.u32 1.1754944e-38, %v228
    %v230 = vsel %vm227, %v229, %v225
    %v231 = vrcp.pop %v202
    %v232 = vmul.f32 %v202, %v231
    %v233 = vsub.f32 1.0, %v232
    %v234 = vmul.f32 %v231, %v233
    %v235 = vadd.f32 %v231, %v234
    %vm236 = vweird.f32 %v202
    %vm237 = vweird.f32 %v231
    %vm238 = vmor %vm236, %vm237
    %v239 = vsel %vm238, %v231, %v235
    %v240 = vand.u32 2147483647, %v202
    %vm241 = vcmp.eq.f32.partialorder %v240, 8.507059e+37
    %v242 = vand.u32 %v202, 2147483648
    %v243 = vor.u32 1.1754944e-38, %v242
    %v244 = vsel %vm241, %v243, %v239
    %v245 = vrcp.pop %v203
    %v246 = vmul.f32 %v203, %v245
    %v247 = vsub.f32 1.0, %v246
    %v248 = vmul.f32 %v245, %v247
    %v249 = vadd.f32 %v245, %v248
    %vm250 = vweird.f32 %v203
    %vm251 = vweird.f32 %v245
    %vm252 = vmor %vm250, %vm251
    %v253 = vsel %vm252, %v245, %v249
    %v254 = vand.u32 2147483647, %v203
    %vm255 = vcmp.eq.f32.partialorder %v254, 8.507059e+37
    %v256 = vand.u32 %v203, 2147483648
    %v257 = vor.u32 1.1754944e-38, %v256
    %v258 = vsel %vm255, %v257, %v253
    %v259 = vrcp.pop %v204
    %v260 = vmul.f32 %v204, %v259
    %v261 = vsub.f32 1.0, %v260
    %v262 = vmul.f32 %v259, %v261
    %v263 = vadd.f32 %v259, %v262
    %vm264 = vweird.f32 %v204
    %vm265 = vweird.f32 %v259
    %vm266 = vmor %vm264, %vm265
    %v267 = vsel %vm266, %v259, %v263
    %v268 = vand.u32 2147483647, %v204
    %vm269 = vcmp.eq.f32.partialorder %v268, 8.507059e+37
    %v270 = vand.u32 %v204, 2147483648
    %v271 = vor.u32 1.1754944e-38, %v270
    %v272 = vsel %vm269, %v271, %v267
    %v273 = vrcp.pop %v205
    %v274 = vmul.f32 %v205, %v273
    %v275 = vsub.f32 1.0, %v274
    %v276 = vmul.f32 %v273, %v275
    %v277 = vadd.f32 %v273, %v276
    %vm278 = vweird.f32 %v205
    %vm279 = vweird.f32 %v273
    %vm280 = vmor %vm278, %vm279
    %v281 = vsel %vm280, %v273, %v277
    %v282 = vand.u32 2147483647, %v205
    %vm283 = vcmp.eq.f32.partialorder %v282, 8.507059e+37
    %v284 = vand.u32 %v205, 2147483648
    %v285 = vor.u32 1.1754944e-38, %v284
    %v286 = vsel %vm283, %v285, %v281
    %v287 = vrcp.pop %v206
    %v288 = vmul.f32 %v206, %v287
    %v289 = vsub.f32 1.0, %v288
    %v290 = vmul.f32 %v287, %v289
    %v291 = vadd.f32 %v287, %v290
    %vm292 = vweird.f32 %v206
    %vm293 = vweird.f32 %v287
    %vm294 = vmor %vm292, %vm293
    %v295 = vsel %vm294, %v287, %v291
    %v296 = vand.u32 2147483647, %v206
    %vm297 = vcmp.eq.f32.partialorder %v296, 8.507059e+37
    %v298 = vand.u32 %v206, 2147483648
    %v299 = vor.u32 1.1754944e-38, %v298
    %v300 = vsel %vm297, %v299, %v295
    %v301 = vrcp.pop %v207
    %v302 = vmul.f32 %v207, %v301
    %v303 = vsub.f32 1.0, %v302
    %v304 = vmul.f32 %v301, %v303
    %v305 = vadd.f32 %v301, %v304
    %vm306 = vweird.f32 %v207
    %vm307 = vweird.f32 %v301
    %vm308 = vmor %vm306, %vm307
    %v309 = vsel %vm308, %v301, %v305
    %v310 = vand.u32 2147483647, %v207
    %vm311 = vcmp.eq.f32.partialorder %v310, 8.507059e+37
    %v312 = vand.u32 %v207, 2147483648
    %v313 = vor.u32 1.1754944e-38, %v312
    %v314 = vsel %vm311, %v313, %v309
    %v315 = vrcp.pop %v208
    %v316 = vmul.f32 %v208, %v315
    %v317 = vsub.f32 1.0, %v316
    %v318 = vmul.f32 %v315, %v317
    %v319 = vadd.f32 %v315, %v318
    %vm320 = vweird.f32 %v208
    %vm321 = vweird.f32 %v315
    %vm322 = vmor %vm320, %vm321
    %v323 = vsel %vm322, %v315, %v319
    %v324 = vand.u32 2147483647, %v208
    %vm325 = vcmp.eq.f32.partialorder %v324, 8.507059e+37
    %v326 = vand.u32 %v208, 2147483648
    %v327 = vor.u32 1.1754944e-38, %v326
    %v328 = vsel %vm325, %v327, %v323
    %v329 = vrcp.pop %v209
    %v330 = vmul.f32 %v209, %v329
    %v331 = vsub.f32 1.0, %v330
    %v332 = vmul.f32 %v329, %v331
    %v333 = vadd.f32 %v329, %v332
    %vm334 = vweird.f32 %v209
    %vm335 = vweird.f32 %v329
    %vm336 = vmor %vm334, %vm335
    %v337 = vsel %vm336, %v329, %v333
    %v338 = vand.u32 2147483647, %v209
    %vm339 = vcmp.eq.f32.partialorder %v338, 8.507059e+37
    %v340 = vand.u32 %v209, 2147483648
    %v341 = vor.u32 1.1754944e-38, %v340
    %v342 = vsel %vm339, %v341, %v337
    %v343 = vrcp.pop %v210
    %v344 = vmul.f32 %v210, %v343
    %v345 = vsub.f32 1.0, %v344
    %v346 = vmul.f32 %v343, %v345
    %v347 = vadd.f32 %v343, %v346
    %vm348 = vweird.f32 %v210
    %vm349 = vweird.f32 %v343
    %vm350 = vmor %vm348, %vm349
    %v351 = vsel %vm350, %v343, %v347
    %v352 = vand.u32 2147483647, %v210
    %vm353 = vcmp.eq.f32.partialorder %v352, 8.507059e+37
    %v354 = vand.u32 %v210, 2147483648
    %v355 = vor.u32 1.1754944e-38, %v354
    %v356 = vsel %vm353, %v355, %v351
    %v357 = vrcp.pop %v211
    %v358 = vmul.f32 %v211, %v357
    %v359 = vsub.f32 1.0, %v358
    %v360 = vmul.f32 %v357, %v359
    %v361 = vadd.f32 %v357, %v360
    %vm362 = vweird.f32 %v211
    %vm363 = vweird.f32 %v357
    %vm364 = vmor %vm362, %vm363
    %v365 = vsel %vm364, %v357, %v361
    %v366 = vand.u32 2147483647, %v211
    %vm367 = vcmp.eq.f32.partialorder %v366, 8.507059e+37
    %v368 = vand.u32 %v211, 2147483648
    %v369 = vor.u32 1.1754944e-38, %v368
    %v370 = vsel %vm367, %v369, %v365
    %v371 = vrcp.pop %v212
    %v372 = vmul.f32 %v212, %v371
    %v373 = vsub.f32 1.0, %v372
    %v374 = vmul.f32 %v371, %v373
    %v375 = vadd.f32 %v371, %v374
    %vm376 = vweird.f32 %v212
    %vm377 = vweird.f32 %v371
    %vm378 = vmor %vm376, %vm377
    %v379 = vsel %vm378, %v371, %v375
    %v380 = vand.u32 2147483647, %v212
    %vm381 = vcmp.eq.f32.partialorder %v380, 8.507059e+37
    %v382 = vand.u32 %v212, 2147483648
    %v383 = vor.u32 1.1754944e-38, %v382
    %v384 = vsel %vm381, %v383, %v379
    %v385 = vrcp.pop %v213
    %v386 = vmul.f32 %v213, %v385
    %v387 = vsub.f32 1.0, %v386
    %v388 = vmul.f32 %v385, %v387
    %v389 = vadd.f32 %v385, %v388
    %vm390 = vweird.f32 %v213
    %vm391 = vweird.f32 %v385
    %vm392 = vmor %vm390, %vm391
    %v393 = vsel %vm392, %v385, %v389
    %v394 = vand.u32 2147483647, %v213
    %vm395 = vcmp.eq.f32.partialorder %v394, 8.507059e+37
    %v396 = vand.u32 %v213, 2147483648
    %v397 = vor.u32 1.1754944e-38, %v396
    %v398 = vsel %vm395, %v397, %v393
    %v399 = vrcp.pop %v214
    %v400 = vmul.f32 %v214, %v399
    %v401 = vsub.f32 1.0, %v400
    %v402 = vmul.f32 %v399, %v401
    %v403 = vadd.f32 %v399, %v402
    %vm404 = vweird.f32 %v214
    %vm405 = vweird.f32 %v399
    %vm406 = vmor %vm404, %vm405
    %v407 = vsel %vm406, %v399, %v403
    %v408 = vand.u32 2147483647, %v214
    %vm409 = vcmp.eq.f32.partialorder %v408, 8.507059e+37
    %v410 = vand.u32 %v214, 2147483648
    %v411 = vor.u32 1.1754944e-38, %v410
    %v412 = vsel %vm409, %v411, %v407
    %v413 = vrcp.pop %v215
    %v414 = vmul.f32 %v215, %v413
    %v415 = vsub.f32 1.0, %v414
    %v416 = vmul.f32 %v413, %v415
    %v417 = vadd.f32 %v413, %v416
    %vm418 = vweird.f32 %v215
    %vm419 = vweird.f32 %v413
    %vm420 = vmor %vm418, %vm419
    %v421 = vsel %vm420, %v413, %v417
    %v422 = vand.u32 2147483647, %v215
    %vm423 = vcmp.eq.f32.partialorder %v422, 8.507059e+37
    %v424 = vand.u32 %v215, 2147483648
    %v425 = vor.u32 1.1754944e-38, %v424
    %v426 = vsel %vm423, %v425, %v421
    %v427 = vrcp.pop %v216
    %v428 = vmul.f32 %v216, %v427
    %v429 = vsub.f32 1.0, %v428
    %v430 = vmul.f32 %v427, %v429
    %v431 = vadd.f32 %v427, %v430
    %vm432 = vweird.f32 %v216
    %vm433 = vweird.f32 %v427
    %vm434 = vmor %vm432, %vm433
    %v435 = vsel %vm434, %v427, %v431
    %v436 = vand.u32 2147483647, %v216
    %vm437 = vcmp.eq.f32.partialorder %v436, 8.507059e+37
    %v438 = vand.u32 %v216, 2147483648
    %v439 = vor.u32 1.1754944e-38, %v438
    %v440 = vsel %vm437, %v439, %v435
    %v441 = vadd.f32 %v170, 1.0
    %v442 = vadd.f32 %v172, 1.0
    %v443 = vadd.f32 %v174, 1.0
    %v444 = vadd.f32 %v176, 1.0
    %v445 = vadd.f32 %v178, 1.0
    %v446 = vadd.f32 %v180, 1.0
    %v447 = vadd.f32 %v182, 1.0
    %v448 = vadd.f32 %v184, 1.0
    %v449 = vadd.f32 %v186, 1.0
    %v450 = vadd.f32 %v188, 1.0
    %v451 = vadd.f32 %v190, 1.0
    %v452 = vadd.f32 %v192, 1.0
    %v453 = vadd.f32 %v194, 1.0
    %v454 = vadd.f32 %v196, 1.0
    %v455 = vadd.f32 %v198, 1.0
    %v456 = vadd.f32 %v200, 1.0
    %v457 = vrsqrt.pop %v441
    %v458 = vmul.f32 %v457, %v441
    %v459 = vmul.f32 %v458, %v457
    %v460 = vmul.f32 0.5, %v459
    %v461 = vsub.f32 1.5, %v460
    %v462 = vmul.f32 %v457, %v461
    %vm463 = vweird.f32 %v441
    %vm464 = vweird.f32 %v457
    %vm465 = vmor %vm463, %vm464
    %v466 = vsel %vm465, %v457, %v462
    %v467 = vrsqrt.pop %v442
    %v468 = vmul.f32 %v467, %v442
    %v469 = vmul.f32 %v468, %v467
    %v470 = vmul.f32 0.5, %v469
    %v471 = vsub.f32 1.5, %v470
    %v472 = vmul.f32 %v467, %v471
    %vm473 = vweird.f32 %v442
    %vm474 = vweird.f32 %v467
    %vm475 = vmor %vm473, %vm474
    %v476 = vsel %vm475, %v467, %v472
    %v477 = vrsqrt.pop %v443
    %v478 = vmul.f32 %v477, %v443
    %v479 = vmul.f32 %v478, %v477
    %v480 = vmul.f32 0.5, %v479
    %v481 = vsub.f32 1.5, %v480
    %v482 = vmul.f32 %v477, %v481
    %vm483 = vweird.f32 %v443
    %vm484 = vweird.f32 %v477
    %vm485 = vmor %vm483, %vm484
    %v486 = vsel %vm485, %v477, %v482
    %v487 = vrsqrt.pop %v444
    %v488 = vmul.f32 %v487, %v444
    %v489 = vmul.f32 %v488, %v487
    %v490 = vmul.f32 0.5, %v489
    %v491 = vsub.f32 1.5, %v490
    %v492 = vmul.f32 %v487, %v491
    %vm493 = vweird.f32 %v444
    %vm494 = vweird.f32 %v487
    %vm495 = vmor %vm493, %vm494
    %v496 = vsel %vm495, %v487, %v492
    %v497 = vrsqrt.pop %v445
    %v498 = vmul.f32 %v497, %v445
    %v499 = vmul.f32 %v498, %v497
    %v500 = vmul.f32 0.5, %v499
    %v501 = vsub.f32 1.5, %v500
    %v502 = vmul.f32 %v497, %v501
    %vm503 = vweird.f32 %v445
    %vm504 = vweird.f32 %v497
    %vm505 = vmor %vm503, %vm504
    %v506 = vsel %vm505, %v497, %v502
    %v507 = vrsqrt.pop %v446
    %v508 = vmul.f32 %v507, %v446
    %v509 = vmul.f32 %v508, %v507
    %v510 = vmul.f32 0.5, %v509
    %v511 = vsub.f32 1.5, %v510
    %v512 = vmul.f32 %v507, %v511
    %vm513 = vweird.f32 %v446
    %vm514 = vweird.f32 %v507
    %vm515 = vmor %vm513, %vm514
    %v516 = vsel %vm515, %v507, %v512
    %v517 = vrsqrt.pop %v447
    %v518 = vmul.f32 %v517, %v447
    %v519 = vmul.f32 %v518, %v517
    %v520 = vmul.f32 0.5, %v519
    %v521 = vsub.f32 1.5, %v520
    %v522 = vmul.f32 %v517, %v521
    %vm523 = vweird.f32 %v447
    %vm524 = vweird.f32 %v517
    %vm525 = vmor %vm523, %vm524
    %v526 = vsel %vm525, %v517, %v522
    %v527 = vrsqrt.pop %v448
    %v528 = vmul.f32 %v527, %v448
    %v529 = vmul.f32 %v528, %v527
    %v530 = vmul.f32 0.5, %v529
    %v531 = vsub.f32 1.5, %v530
    %v532 = vmul.f32 %v527, %v531
    %vm533 = vweird.f32 %v448
    %vm534 = vweird.f32 %v527
    %vm535 = vmor %vm533, %vm534
    %v536 = vsel %vm535, %v527, %v532
    %v537 = vrsqrt.pop %v449
    %v538 = vmul.f32 %v537, %v449
    %v539 = vmul.f32 %v538, %v537
    %v540 = vmul.f32 0.5, %v539
    %v541 = vsub.f32 1.5, %v540
    %v542 = vmul.f32 %v537, %v541
    %vm543 = vweird.f32 %v449
    %vm544 = vweird.f32 %v537
    %vm545 = vmor %vm543, %vm544
    %v546 = vsel %vm545, %v537, %v542
    %v547 = vrsqrt.pop %v450
    %v548 = vmul.f32 %v547, %v450
    %v549 = vmul.f32 %v548, %v547
    %v550 = vmul.f32 0.5, %v549
    %v551 = vsub.f32 1.5, %v550
    %v552 = vmul.f32 %v547, %v551
    %vm553 = vweird.f32 %v450
    %vm554 = vweird.f32 %v547
    %vm555 = vmor %vm553, %vm554
    %v556 = vsel %vm555, %v547, %v552
    %v557 = vrsqrt.pop %v451
    %v558 = vmul.f32 %v557, %v451
    %v559 = vmul.f32 %v558, %v557
    %v560 = vmul.f32 0.5, %v559
    %v561 = vsub.f32 1.5, %v560
    %v562 = vmul.f32 %v557, %v561
    %vm563 = vweird.f32 %v451
    %vm564 = vweird.f32 %v557
    %vm565 = vmor %vm563, %vm564
    %v566 = vsel %vm565, %v557, %v562
    %v567 = vrsqrt.pop %v452
    %v568 = vmul.f32 %v567, %v452
    %v569 = vmul.f32 %v568, %v567
    %v570 = vmul.f32 0.5, %v569
    %v571 = vsub.f32 1.5, %v570
    %v572 = vmul.f32 %v567, %v571
    %vm573 = vweird.f32 %v452
    %vm574 = vweird.f32 %v567
    %vm575 = vmor %vm573, %vm574
    %v576 = vsel %vm575, %v567, %v572
    %v577 = vrsqrt.pop %v453
    %v578 = vmul.f32 %v577, %v453
    %v579 = vmul.f32 %v578, %v577
    %v580 = vmul.f32 0.5, %v579
    %v581 = vsub.f32 1.5, %v580
    %v582 = vmul.f32 %v577, %v581
    %vm583 = vweird.f32 %v453
    %vm584 = vweird.f32 %v577
    %vm585 = vmor %vm583, %vm584
    %v586 = vsel %vm585, %v577, %v582
    %v587 = vrsqrt.pop %v454
    %v588 = vmul.f32 %v587, %v454
    %v589 = vmul.f32 %v588, %v587
    %v590 = vmul.f32 0.5, %v589
    %v591 = vsub.f32 1.5, %v590
    %v592 = vmul.f32 %v587, %v591
    %vm593 = vweird.f32 %v454
    %vm594 = vweird.f32 %v587
    %vm595 = vmor %vm593, %vm594
    %v596 = vsel %vm595, %v587, %v592
    %v597 = vrsqrt.pop %v455
    %v598 = vmul.f32 %v597, %v455
    %v599 = vmul.f32 %v598, %v597
    %v600 = vmul.f32 0.5, %v599
    %v601 = vsub.f32 1.5, %v600
    %v602 = vmul.f32 %v597, %v601
    %vm603 = vweird.f32 %v455
    %vm604 = vweird.f32 %v597
    %vm605 = vmor %vm603, %vm604
    %v606 = vsel %vm605, %v597, %v602
    %v607 = vrsqrt.pop %v456
    %v608 = vmul.f32 %v607, %v456
    %v609 = vmul.f32 %v608, %v607
    %v610 = vmul.f32 0.5, %v609
    %v611 = vsub.f32 1.5, %v610
    %v612 = vmul.f32 %v607, %v611
    %vm613 = vweird.f32 %v456
    %vm614 = vweird.f32 %v607
    %vm615 = vmor %vm613, %vm614
    %v616 = vsel %vm615, %v607, %v612
    %v617 = vld [vmem:[#allocation5] sm:$0xf]
    %v618 = vld [vmem:[#allocation5 + $0x4] sm:$0xf]
    %v619 = vld [vmem:[#allocation5 + $0x8] sm:$0xf]
    %v620 = vld [vmem:[#allocation5 + $0xc] sm:$0xf]
    %v621 = vld [vmem:[#allocation5 + $0x10] sm:$0xf]
    %v622 = vld [vmem:[#allocation5 + $0x14] sm:$0xf]
    %v623 = vld [vmem:[#allocation5 + $0x18] sm:$0xf]
    %v624 = vld [vmem:[#allocation5 + $0x1c] sm:$0xf]
    %v625 = vld [vmem:[#allocation5 + $0x20] sm:$0xf]
    %v626 = vld [vmem:[#allocation5 + $0x24] sm:$0xf]
    %v627 = vld [vmem:[#allocation5 + $0x28] sm:$0xf]
    %v628 = vld [vmem:[#allocation5 + $0x2c] sm:$0xf]
    %v629 = vld [vmem:[#allocation5 + $0x30] sm:$0xf]
    %v630 = vld [vmem:[#allocation5 + $0x34] sm:$0xf]
    %v631 = vld [vmem:[#allocation5 + $0x38] sm:$0xf]
    %v632 = vld [vmem:[#allocation5 + $0x3c] sm:$0xf]
    %v649 = vunpack.c.l.b16 %v617
    %v650 = vunpack.c.l.b16 %v618
    %v651 = vunpack.c.l.b16 %v619
    %v652 = vunpack.c.l.b16 %v620
    %v653 = vunpack.c.l.b16 %v621
    %v654 = vunpack.c.l.b16 %v622
    %v655 = vunpack.c.l.b16 %v623
    %v656 = vunpack.c.l.b16 %v624
    %v657 = vunpack.c.l.b16 %v625
    %v658 = vunpack.c.l.b16 %v626
    %v659 = vunpack.c.l.b16 %v627
    %v660 = vunpack.c.l.b16 %v628
    %v661 = vunpack.c.l.b16 %v629
    %v662 = vunpack.c.l.b16 %v630
    %v663 = vunpack.c.l.b16 %v631
    %v664 = vunpack.c.l.b16 %v632
    %v665 = vpack.c.b16 %v650, %v649
    %v666 = vpack.c.b16 %v652, %v651
    %v667 = vpack.c.b16 %v654, %v653
    %v668 = vpack.c.b16 %v656, %v655
    %v669 = vpack.c.b16 %v658, %v657
    %v670 = vpack.c.b16 %v660, %v659
    %v671 = vpack.c.b16 %v662, %v661
    %v672 = vpack.c.b16 %v664, %v663
    %681 = vmatpush.bf16.msra.mxu0 %v672
    %682 = vmatpush.bf16.msra.mxu0 %v671
    %683 = vmatpush.bf16.msra.mxu0 %v670
    %684 = vmatpush.bf16.msra.mxu0 %v669
    %685 = vmatpush.bf16.msra.mxu0 %v668
    %686 = vmatpush.bf16.msra.mxu0 %v667
    %687 = vmatpush.bf16.msra.mxu0 %v666
    %688 = vmatpush.bf16.msra.mxu0 %v665
    %689 = vmatmul.bf16.gmra.mxu0 %v161
    %v690 = vpop.f32.mrf.mxu0
    %v691 = vadd.f32 0.0, %v690
    %v692 = vpop.f32.mrf.mxu0
    %v693 = vadd.f32 0.0, %v692
    %694 = vmatmul.bf16.gmra.mxu0 %v162
    %v695 = vpop.f32.mrf.mxu0
    %v696 = vadd.f32 0.0, %v695
    %v697 = vpop.f32.mrf.mxu0
    %v698 = vadd.f32 0.0, %v697
    %699 = vmatmul.bf16.gmra.mxu0 %v163
    %v700 = vpop.f32.mrf.mxu0
    %v701 = vadd.f32 0.0, %v700
    %v702 = vpop.f32.mrf.mxu0
    %v703 = vadd.f32 0.0, %v702
    %704 = vmatmul.bf16.gmra.mxu0 %v164
    %v705 = vpop.f32.mrf.mxu0
    %v706 = vadd.f32 0.0, %v705
    %v707 = vpop.f32.mrf.mxu0
    %v708 = vadd.f32 0.0, %v707
    %709 = vmatmul.bf16.gmra.mxu0 %v165
    %v710 = vpop.f32.mrf.mxu0
    %v711 = vadd.f32 0.0, %v710
    %v712 = vpop.f32.mrf.mxu0
    %v713 = vadd.f32 0.0, %v712
    %714 = vmatmul.bf16.gmra.mxu0 %v166
    %v715 = vpop.f32.mrf.mxu0
    %v716 = vadd.f32 0.0, %v715
    %v717 = vpop.f32.mrf.mxu0
    %v718 = vadd.f32 0.0, %v717
    %719 = vmatmul.bf16.gmra.mxu0 %v167
    %v720 = vpop.f32.mrf.mxu0
    %v721 = vadd.f32 0.0, %v720
    %v722 = vpop.f32.mrf.mxu0
    %v723 = vadd.f32 0.0, %v722
    %724 = vmatmul.bf16.gmra.mxu0 %v168
    %v725 = vpop.f32.mrf.mxu0
    %v726 = vadd.f32 0.0, %v725
    %v727 = vpop.f32.mrf.mxu0
    %v728 = vadd.f32 0.0, %v727
    %729 = vdwg.mxu0
    %v730 = vmul.f32 %v691, %v230
    %v731 = vmul.f32 %v693, %v244
    %v732 = vmul.f32 %v696, %v258
    %v733 = vmul.f32 %v698, %v272
    %v734 = vmul.f32 %v701, %v286
    %v735 = vmul.f32 %v703, %v300
    %v736 = vmul.f32 %v706, %v314
    %v737 = vmul.f32 %v708, %v328
    %v738 = vmul.f32 %v711, %v342
    %v739 = vmul.f32 %v713, %v356
    %v740 = vmul.f32 %v716, %v370
    %v741 = vmul.f32 %v718, %v384
    %v742 = vmul.f32 %v721, %v398
    %v743 = vmul.f32 %v723, %v412
    %v744 = vmul.f32 %v726, %v426
    %v745 = vmul.f32 %v728, %v440
    %v746 = vpack.c.bf16 %v731, %v730
    %v747 = vpack.c.bf16 %v733, %v732
    %v748 = vpack.c.bf16 %v735, %v734
    %v749 = vpack.c.bf16 %v737, %v736
    %v750 = vpack.c.bf16 %v739, %v738
    %v751 = vpack.c.bf16 %v741, %v740
    %v752 = vpack.c.bf16 %v743, %v742
    %v753 = vpack.c.bf16 %v745, %v744
    %v754 = vld [vmem:[#allocation7] sm:$0xf]
    %v755 = vld [vmem:[#allocation7 + $0x4] sm:$0xf]
    %v756 = vld [vmem:[#allocation7 + $0x8] sm:$0xf]
    %v757 = vld [vmem:[#allocation7 + $0xc] sm:$0xf]
    %v758 = vld [vmem:[#allocation7 + $0x10] sm:$0xf]
    %v759 = vld [vmem:[#allocation7 + $0x14] sm:$0xf]
    %v760 = vld [vmem:[#allocation7 + $0x18] sm:$0xf]
    %v761 = vld [vmem:[#allocation7 + $0x1c] sm:$0xf]
    %v762 = vld [vmem:[#allocation7 + $0x20] sm:$0xf]
    %v763 = vld [vmem:[#allocation7 + $0x24] sm:$0xf]
    %v764 = vld [vmem:[#allocation7 + $0x28] sm:$0xf]
    %v765 = vld [vmem:[#allocation7 + $0x2c] sm:$0xf]
    %v766 = vld [vmem:[#allocation7 + $0x30] sm:$0xf]
    %v767 = vld [vmem:[#allocation7 + $0x34] sm:$0xf]
    %v768 = vld [vmem:[#allocation7 + $0x38] sm:$0xf]
    %v769 = vld [vmem:[#allocation7 + $0x3c] sm:$0xf]
    %v770 = vld [vmem:[#allocation8] sm:$0xf]
    %v771 = vld [vmem:[#allocation8 + $0x4] sm:$0xf]
    %v772 = vld [vmem:[#allocation8 + $0x8] sm:$0xf]
    %v773 = vld [vmem:[#allocation8 + $0xc] sm:$0xf]
    %v774 = vld [vmem:[#allocation8 + $0x10] sm:$0xf]
    %v775 = vld [vmem:[#allocation8 + $0x14] sm:$0xf]
    %v776 = vld [vmem:[#allocation8 + $0x18] sm:$0xf]
    %v777 = vld [vmem:[#allocation8 + $0x1c] sm:$0xf]
    %v778 = vld [vmem:[#allocation8 + $0x20] sm:$0xf]
    %v779 = vld [vmem:[#allocation8 + $0x24] sm:$0xf]
    %v780 = vld [vmem:[#allocation8 + $0x28] sm:$0xf]
    %v781 = vld [vmem:[#allocation8 + $0x2c] sm:$0xf]
    %v782 = vld [vmem:[#allocation8 + $0x30] sm:$0xf]
    %v783 = vld [vmem:[#allocation8 + $0x34] sm:$0xf]
    %v784 = vld [vmem:[#allocation8 + $0x38] sm:$0xf]
    %v785 = vld [vmem:[#allocation8 + $0x3c] sm:$0xf]
    %v802 = vunpack.c.l.b16 %v770
    %v803 = vunpack.c.l.b16 %v771
    %v804 = vunpack.c.l.b16 %v772
    %v805 = vunpack.c.l.b16 %v773
    %v806 = vunpack.c.l.b16 %v774
    %v807 = vunpack.c.l.b16 %v775
    %v808 = vunpack.c.l.b16 %v776
    %v809 = vunpack.c.l.b16 %v777
    %v810 = vunpack.c.l.b16 %v778
    %v811 = vunpack.c.l.b16 %v779
    %v812 = vunpack.c.l.b16 %v780
    %v813 = vunpack.c.l.b16 %v781
    %v814 = vunpack.c.l.b16 %v782
    %v815 = vunpack.c.l.b16 %v783
    %v816 = vunpack.c.l.b16 %v784
    %v817 = vunpack.c.l.b16 %v785
    %v818 = vpack.c.b16 %v803, %v802
    %v819 = vpack.c.b16 %v805, %v804
    %v820 = vpack.c.b16 %v807, %v806
    %v821 = vpack.c.b16 %v809, %v808
    %v822 = vpack.c.b16 %v811, %v810
    %v823 = vpack.c.b16 %v813, %v812
    %v824 = vpack.c.b16 %v815, %v814
    %v825 = vpack.c.b16 %v817, %v816
    %834 = vmatpush.bf16.msra.mxu0 %v825
    %835 = vmatpush.bf16.msra.mxu0 %v824
    %836 = vmatpush.bf16.msra.mxu0 %v823
    %837 = vmatpush.bf16.msra.mxu0 %v822
    %838 = vmatpush.bf16.msra.mxu0 %v821
    %839 = vmatpush.bf16.msra.mxu0 %v820
    %840 = vmatpush.bf16.msra.mxu0 %v819
    %841 = vmatpush.bf16.msra.mxu0 %v818
    %842 = vmatmul.bf16.gmra.mxu0 %v665
    %v843 = vpop.f32.mrf.mxu0
    %v844 = vadd.f32 0.0, %v843
    %v845 = vpop.f32.mrf.mxu0
    %v846 = vadd.f32 0.0, %v845
    %847 = vmatmul.bf16.gmra.mxu0 %v666
    %v848 = vpop.f32.mrf.mxu0
    %v849 = vadd.f32 0.0, %v848
    %v850 = vpop.f32.mrf.mxu0
    %v851 = vadd.f32 0.0, %v850
    %852 = vmatmul.bf16.gmra.mxu0 %v667
    %v853 = vpop.f32.mrf.mxu0
    %v854 = vadd.f32 0.0, %v853
    %v855 = vpop.f32.mrf.mxu0
    %v856 = vadd.f32 0.0, %v855
    %857 = vmatmul.bf16.gmra.mxu0 %v668
    %v858 = vpop.f32.mrf.mxu0
    %v859 = vadd.f32 0.0, %v858
    %v860 = vpop.f32.mrf.mxu0
    %v861 = vadd.f32 0.0, %v860
    %862 = vmatmul.bf16.gmra.mxu0 %v669
    %v863 = vpop.f32.mrf.mxu0
    %v864 = vadd.f32 0.0, %v863
    %v865 = vpop.f32.mrf.mxu0
    %v866 = vadd.f32 0.0, %v865
    %867 = vmatmul.bf16.gmra.mxu0 %v670
    %v868 = vpop.f32.mrf.mxu0
    %v869 = vadd.f32 0.0, %v868
    %v870 = vpop.f32.mrf.mxu0
    %v871 = vadd.f32 0.0, %v870
    %872 = vmatmul.bf16.gmra.mxu0 %v671
    %v873 = vpop.f32.mrf.mxu0
    %v874 = vadd.f32 0.0, %v873
    %v875 = vpop.f32.mrf.mxu0
    %v876 = vadd.f32 0.0, %v875
    %877 = vmatmul.bf16.gmra.mxu0 %v672
    %v878 = vpop.f32.mrf.mxu0
    %v879 = vadd.f32 0.0, %v878
    %v880 = vpop.f32.mrf.mxu0
    %v881 = vadd.f32 0.0, %v880
    %882 = vdwg.mxu0
    %v899 = vunpack.c.l.b16 %v754
    %v900 = vunpack.c.l.b16 %v755
    %v901 = vunpack.c.l.b16 %v756
    %v902 = vunpack.c.l.b16 %v757
    %v903 = vunpack.c.l.b16 %v758
    %v904 = vunpack.c.l.b16 %v759
    %v905 = vunpack.c.l.b16 %v760
    %v906 = vunpack.c.l.b16 %v761
    %v907 = vunpack.c.l.b16 %v762
    %v908 = vunpack.c.l.b16 %v763
    %v909 = vunpack.c.l.b16 %v764
    %v910 = vunpack.c.l.b16 %v765
    %v911 = vunpack.c.l.b16 %v766
    %v912 = vunpack.c.l.b16 %v767
    %v913 = vunpack.c.l.b16 %v768
    %v914 = vunpack.c.l.b16 %v769
    %v915 = vpack.c.b16 %v900, %v899
    %v916 = vpack.c.b16 %v902, %v901
    %v917 = vpack.c.b16 %v904, %v903
    %v918 = vpack.c.b16 %v906, %v905
    %v919 = vpack.c.b16 %v908, %v907
    %v920 = vpack.c.b16 %v910, %v909
    %v921 = vpack.c.b16 %v912, %v911
    %v922 = vpack.c.b16 %v914, %v913
    %931 = vmatpush.bf16.msra.mxu0 %v922
    %932 = vmatpush.bf16.msra.mxu0 %v921
    %933 = vmatpush.bf16.msra.mxu0 %v920
    %934 = vmatpush.bf16.msra.mxu0 %v919
    %935 = vmatpush.bf16.msra.mxu0 %v918
    %936 = vmatpush.bf16.msra.mxu0 %v917
    %937 = vmatpush.bf16.msra.mxu0 %v916
    %938 = vmatpush.bf16.msra.mxu0 %v915
    %939 = vmatmul.bf16.gmra.mxu0 %v746
    %v940 = vpop.f32.mrf.mxu0
    %v941 = vadd.f32 %v844, %v940
    %v942 = vpop.f32.mrf.mxu0
    %v943 = vadd.f32 %v846, %v942
    %944 = vmatmul.bf16.gmra.mxu0 %v747
    %v945 = vpop.f32.mrf.mxu0
    %v946 = vadd.f32 %v849, %v945
    %v947 = vpop.f32.mrf.mxu0
    %v948 = vadd.f32 %v851, %v947
    %949 = vmatmul.bf16.gmra.mxu0 %v748
    %v950 = vpop.f32.mrf.mxu0
    %v951 = vadd.f32 %v854, %v950
    %v952 = vpop.f32.mrf.mxu0
    %v953 = vadd.f32 %v856, %v952
    %954 = vmatmul.bf16.gmra.mxu0 %v749
    %v955 = vpop.f32.mrf.mxu0
    %v956 = vadd.f32 %v859, %v955
    %v957 = vpop.f32.mrf.mxu0
    %v958 = vadd.f32 %v861, %v957
    %959 = vmatmul.bf16.gmra.mxu0 %v750
    %v960 = vpop.f32.mrf.mxu0
    %v961 = vadd.f32 %v864, %v960
    %v962 = vpop.f32.mrf.mxu0
    %v963 = vadd.f32 %v866, %v962
    %964 = vmatmul.bf16.gmra.mxu0 %v751
    %v965 = vpop.f32.mrf.mxu0
    %v966 = vadd.f32 %v869, %v965
    %v967 = vpop.f32.mrf.mxu0
    %v968 = vadd.f32 %v871, %v967
    %969 = vmatmul.bf16.gmra.mxu0 %v752
    %v970 = vpop.f32.mrf.mxu0
    %v971 = vadd.f32 %v874, %v970
    %v972 = vpop.f32.mrf.mxu0
    %v973 = vadd.f32 %v876, %v972
    %974 = vmatmul.bf16.gmra.mxu0 %v753
    %v975 = vpop.f32.mrf.mxu0
    %v976 = vadd.f32 %v879, %v975
    %v977 = vpop.f32.mrf.mxu0
    %v978 = vadd.f32 %v881, %v977
    %979 = vdwg.mxu0
    %v980 = vld [vmem:[%s4] sm:$0x1]
    %v982 = vperm.slane %v980, 0
    %v984 = vadd.f32 %v941, %v982
    %v985 = vadd.f32 %v943, %v982
    %v986 = vadd.f32 %v946, %v982
    %v987 = vadd.f32 %v948, %v982
    %v988 = vadd.f32 %v951, %v982
    %v989 = vadd.f32 %v953, %v982
    %v990 = vadd.f32 %v956, %v982
    %v991 = vadd.f32 %v958, %v982
    %v992 = vadd.f32 %v961, %v982
    %v993 = vadd.f32 %v963, %v982
    %v994 = vadd.f32 %v966, %v982
    %v995 = vadd.f32 %v968, %v982
    %v996 = vadd.f32 %v971, %v982
    %v997 = vadd.f32 %v973, %v982
    %v998 = vadd.f32 %v976, %v982
    %v999 = vadd.f32 %v978, %v982
    %v1000 = vmax.f32 %v984, 0.0
    %v1001 = vmax.f32 %v985, 0.0
    %v1002 = vmax.f32 %v986, 0.0
    %v1003 = vmax.f32 %v987, 0.0
    %v1004 = vmax.f32 %v988, 0.0
    %v1005 = vmax.f32 %v989, 0.0
    %v1006 = vmax.f32 %v990, 0.0
    %v1007 = vmax.f32 %v991, 0.0
    %v1008 = vmax.f32 %v992, 0.0
    %v1009 = vmax.f32 %v993, 0.0
    %v1010 = vmax.f32 %v994, 0.0
    %v1011 = vmax.f32 %v995, 0.0
    %v1012 = vmax.f32 %v996, 0.0
    %v1013 = vmax.f32 %v997, 0.0
    %v1014 = vmax.f32 %v998, 0.0
    %v1015 = vmax.f32 %v999, 0.0
    %v1016 = vpack.c.bf16 %v1001, %v1000
    %v1017 = vpack.c.bf16 %v1003, %v1002
    %v1018 = vpack.c.bf16 %v1005, %v1004
    %v1019 = vpack.c.bf16 %v1007, %v1006
    %v1020 = vpack.c.bf16 %v1009, %v1008
    %v1021 = vpack.c.bf16 %v1011, %v1010
    %v1022 = vpack.c.bf16 %v1013, %v1012
    %v1023 = vpack.c.bf16 %v1015, %v1014
    %1024 = vmatpush.bf16.msra.mxu0 %v1023
    %1025 = vmatpush.bf16.msra.mxu0 %v1022
    %1026 = vmatpush.bf16.msra.mxu0 %v1021
    %1027 = vmatpush.bf16.msra.mxu0 %v1020
    %1028 = vmatpush.bf16.msra.mxu0 %v1019
    %1029 = vmatpush.bf16.msra.mxu0 %v1018
    %1030 = vmatpush.bf16.msra.mxu0 %v1017
    %1031 = vmatpush.bf16.msra.mxu0 %v1016
    %1032 = vmatmul.bf16.gmra.mxu0 %v161
    %v1033 = vpop.f32.mrf.mxu0
    %v1034 = vadd.f32 0.0, %v1033
    %v1035 = vpop.f32.mrf.mxu0
    %v1036 = vadd.f32 0.0, %v1035
    %1037 = vmatmul.bf16.gmra.mxu0 %v162
    %v1038 = vpop.f32.mrf.mxu0
    %v1039 = vadd.f32 0.0, %v1038
    %v1040 = vpop.f32.mrf.mxu0
    %v1041 = vadd.f32 0.0, %v1040
    %1042 = vmatmul.bf16.gmra.mxu0 %v163
    %v1043 = vpop.f32.mrf.mxu0
    %v1044 = vadd.f32 0.0, %v1043
    %v1045 = vpop.f32.mrf.mxu0
    %v1046 = vadd.f32 0.0, %v1045
    %1047 = vmatmul.bf16.gmra.mxu0 %v164
    %v1048 = vpop.f32.mrf.mxu0
    %v1049 = vadd.f32 0.0, %v1048
    %v1050 = vpop.f32.mrf.mxu0
    %v1051 = vadd.f32 0.0, %v1050
    %1052 = vmatmul.bf16.gmra.mxu0 %v165
    %v1053 = vpop.f32.mrf.mxu0
    %v1054 = vadd.f32 0.0, %v1053
    %v1055 = vpop.f32.mrf.mxu0
    %v1056 = vadd.f32 0.0, %v1055
    %1057 = vmatmul.bf16.gmra.mxu0 %v166
    %v1058 = vpop.f32.mrf.mxu0
    %v1059 = vadd.f32 0.0, %v1058
    %v1060 = vpop.f32.mrf.mxu0
    %v1061 = vadd.f32 0.0, %v1060
    %1062 = vmatmul.bf16.gmra.mxu0 %v167
    %v1063 = vpop.f32.mrf.mxu0
    %v1064 = vadd.f32 0.0, %v1063
    %v1065 = vpop.f32.mrf.mxu0
    %v1066 = vadd.f32 0.0, %v1065
    %1067 = vmatmul.bf16.gmra.mxu0 %v168
    %v1068 = vpop.f32.mrf.mxu0
    %v1069 = vadd.f32 0.0, %v1068
    %v1070 = vpop.f32.mrf.mxu0
    %v1071 = vadd.f32 0.0, %v1070
    %1072 = vdwg.mxu0
    %v1073 = vmul.f32 %v1034, %v230
    %v1074 = vmul.f32 %v1036, %v244
    %v1075 = vmul.f32 %v1039, %v258
    %v1076 = vmul.f32 %v1041, %v272
    %v1077 = vmul.f32 %v1044, %v286
    %v1078 = vmul.f32 %v1046, %v300
    %v1079 = vmul.f32 %v1049, %v314
    %v1080 = vmul.f32 %v1051, %v328
    %v1081 = vmul.f32 %v1054, %v342
    %v1082 = vmul.f32 %v1056, %v356
    %v1083 = vmul.f32 %v1059, %v370
    %v1084 = vmul.f32 %v1061, %v384
    %v1085 = vmul.f32 %v1064, %v398
    %v1086 = vmul.f32 %v1066, %v412
    %v1087 = vmul.f32 %v1069, %v426
    %v1088 = vmul.f32 %v1071, %v440
    %v1089 = vpack.c.bf16 %v1074, %v1073
    %v1090 = vpack.c.bf16 %v1076, %v1075
    %v1091 = vpack.c.bf16 %v1078, %v1077
    %v1092 = vpack.c.bf16 %v1080, %v1079
    %v1093 = vpack.c.bf16 %v1082, %v1081
    %v1094 = vpack.c.bf16 %v1084, %v1083
    %v1095 = vpack.c.bf16 %v1086, %v1085
    %v1096 = vpack.c.bf16 %v1088, %v1087
    %v1097 = vld [vmem:[#allocation10] sm:$0xf]
    %v1098 = vld [vmem:[#allocation10 + $0x4] sm:$0xf]
    %v1099 = vld [vmem:[#allocation10 + $0x8] sm:$0xf]
    %v1100 = vld [vmem:[#allocation10 + $0xc] sm:$0xf]
    %v1101 = vld [vmem:[#allocation10 + $0x10] sm:$0xf]
    %v1102 = vld [vmem:[#allocation10 + $0x14] sm:$0xf]
    %v1103 = vld [vmem:[#allocation10 + $0x18] sm:$0xf]
    %v1104 = vld [vmem:[#allocation10 + $0x1c] sm:$0xf]
    %v1105 = vld [vmem:[#allocation10 + $0x20] sm:$0xf]
    %v1106 = vld [vmem:[#allocation10 + $0x24] sm:$0xf]
    %v1107 = vld [vmem:[#allocation10 + $0x28] sm:$0xf]
    %v1108 = vld [vmem:[#allocation10 + $0x2c] sm:$0xf]
    %v1109 = vld [vmem:[#allocation10 + $0x30] sm:$0xf]
    %v1110 = vld [vmem:[#allocation10 + $0x34] sm:$0xf]
    %v1111 = vld [vmem:[#allocation10 + $0x38] sm:$0xf]
    %v1112 = vld [vmem:[#allocation10 + $0x3c] sm:$0xf]
    %v1113 = vld [vmem:[#allocation11] sm:$0xf]
    %v1114 = vld [vmem:[#allocation11 + $0x4] sm:$0xf]
    %v1115 = vld [vmem:[#allocation11 + $0x8] sm:$0xf]
    %v1116 = vld [vmem:[#allocation11 + $0xc] sm:$0xf]
    %v1117 = vld [vmem:[#allocation11 + $0x10] sm:$0xf]
    %v1118 = vld [vmem:[#allocation11 + $0x14] sm:$0xf]
    %v1119 = vld [vmem:[#allocation11 + $0x18] sm:$0xf]
    %v1120 = vld [vmem:[#allocation11 + $0x1c] sm:$0xf]
    %v1121 = vld [vmem:[#allocation11 + $0x20] sm:$0xf]
    %v1122 = vld [vmem:[#allocation11 + $0x24] sm:$0xf]
    %v1123 = vld [vmem:[#allocation11 + $0x28] sm:$0xf]
    %v1124 = vld [vmem:[#allocation11 + $0x2c] sm:$0xf]
    %v1125 = vld [vmem:[#allocation11 + $0x30] sm:$0xf]
    %v1126 = vld [vmem:[#allocation11 + $0x34] sm:$0xf]
    %v1127 = vld [vmem:[#allocation11 + $0x38] sm:$0xf]
    %v1128 = vld [vmem:[#allocation11 + $0x3c] sm:$0xf]
    %v1145 = vunpack.c.l.b16 %v1113
    %v1146 = vunpack.c.l.b16 %v1114
    %v1147 = vunpack.c.l.b16 %v1115
    %v1148 = vunpack.c.l.b16 %v1116
    %v1149 = vunpack.c.l.b16 %v1117
    %v1150 = vunpack.c.l.b16 %v1118
    %v1151 = vunpack.c.l.b16 %v1119
    %v1152 = vunpack.c.l.b16 %v1120
    %v1153 = vunpack.c.l.b16 %v1121
    %v1154 = vunpack.c.l.b16 %v1122
    %v1155 = vunpack.c.l.b16 %v1123
    %v1156 = vunpack.c.l.b16 %v1124
    %v1157 = vunpack.c.l.b16 %v1125
    %v1158 = vunpack.c.l.b16 %v1126
    %v1159 = vunpack.c.l.b16 %v1127
    %v1160 = vunpack.c.l.b16 %v1128
    %v1161 = vpack.c.b16 %v1146, %v1145
    %v1162 = vpack.c.b16 %v1148, %v1147
    %v1163 = vpack.c.b16 %v1150, %v1149
    %v1164 = vpack.c.b16 %v1152, %v1151
    %v1165 = vpack.c.b16 %v1154, %v1153
    %v1166 = vpack.c.b16 %v1156, %v1155
    %v1167 = vpack.c.b16 %v1158, %v1157
    %v1168 = vpack.c.b16 %v1160, %v1159
    %1177 = vmatpush.bf16.msra.mxu0 %v1168
    %1178 = vmatpush.bf16.msra.mxu0 %v1167
    %1179 = vmatpush.bf16.msra.mxu0 %v1166
    %1180 = vmatpush.bf16.msra.mxu0 %v1165
    %1181 = vmatpush.bf16.msra.mxu0 %v1164
    %1182 = vmatpush.bf16.msra.mxu0 %v1163
    %1183 = vmatpush.bf16.msra.mxu0 %v1162
    %1184 = vmatpush.bf16.msra.mxu0 %v1161
    %1185 = vmatmul.bf16.gmra.mxu0 %v1016
    %v1186 = vpop.f32.mrf.mxu0
    %v1187 = vadd.f32 0.0, %v1186
    %v1188 = vpop.f32.mrf.mxu0
    %v1189 = vadd.f32 0.0, %v1188
    %1190 = vmatmul.bf16.gmra.mxu0 %v1017
    %v1191 = vpop.f32.mrf.mxu0
    %v1192 = vadd.f32 0.0, %v1191
    %v1193 = vpop.f32.mrf.mxu0
    %v1194 = vadd.f32 0.0, %v1193
    %1195 = vmatmul.bf16.gmra.mxu0 %v1018
    %v1196 = vpop.f32.mrf.mxu0
    %v1197 = vadd.f32 0.0, %v1196
    %v1198 = vpop.f32.mrf.mxu0
    %v1199 = vadd.f32 0.0, %v1198
    %1200 = vmatmul.bf16.gmra.mxu0 %v1019
    %v1201 = vpop.f32.mrf.mxu0
    %v1202 = vadd.f32 0.0, %v1201
    %v1203 = vpop.f32.mrf.mxu0
    %v1204 = vadd.f32 0.0, %v1203
    %1205 = vmatmul.bf16.gmra.mxu0 %v1020
    %v1206 = vpop.f32.mrf.mxu0
    %v1207 = vadd.f32 0.0, %v1206
    %v1208 = vpop.f32.mrf.mxu0
    %v1209 = vadd.f32 0.0, %v1208
    %1210 = vmatmul.bf16.gmra.mxu0 %v1021
    %v1211 = vpop.f32.mrf.mxu0
    %v1212 = vadd.f32 0.0, %v1211
    %v1213 = vpop.f32.mrf.mxu0
    %v1214 = vadd.f32 0.0, %v1213
    %1215 = vmatmul.bf16.gmra.mxu0 %v1022
    %v1216 = vpop.f32.mrf.mxu0
    %v1217 = vadd.f32 0.0, %v1216
    %v1218 = vpop.f32.mrf.mxu0
    %v1219 = vadd.f32 0.0, %v1218
    %1220 = vmatmul.bf16.gmra.mxu0 %v1023
    %v1221 = vpop.f32.mrf.mxu0
    %v1222 = vadd.f32 0.0, %v1221
    %v1223 = vpop.f32.mrf.mxu0
    %v1224 = vadd.f32 0.0, %v1223
    %1225 = vdwg.mxu0
    %v1242 = vunpack.c.l.b16 %v1097
    %v1243 = vunpack.c.l.b16 %v1098
    %v1244 = vunpack.c.l.b16 %v1099
    %v1245 = vunpack.c.l.b16 %v1100
    %v1246 = vunpack.c.l.b16 %v1101
    %v1247 = vunpack.c.l.b16 %v1102
    %v1248 = vunpack.c.l.b16 %v1103
    %v1249 = vunpack.c.l.b16 %v1104
    %v1250 = vunpack.c.l.b16 %v1105
    %v1251 = vunpack.c.l.b16 %v1106
    %v1252 = vunpack.c.l.b16 %v1107
    %v1253 = vunpack.c.l.b16 %v1108
    %v1254 = vunpack.c.l.b16 %v1109
    %v1255 = vunpack.c.l.b16 %v1110
    %v1256 = vunpack.c.l.b16 %v1111
    %v1257 = vunpack.c.l.b16 %v1112
    %v1258 = vpack.c.b16 %v1243, %v1242
    %v1259 = vpack.c.b16 %v1245, %v1244
    %v1260 = vpack.c.b16 %v1247, %v1246
    %v1261 = vpack.c.b16 %v1249, %v1248
    %v1262 = vpack.c.b16 %v1251, %v1250
    %v1263 = vpack.c.b16 %v1253, %v1252
    %v1264 = vpack.c.b16 %v1255, %v1254
    %v1265 = vpack.c.b16 %v1257, %v1256
    %1274 = vmatpush.bf16.msra.mxu0 %v1265
    %1275 = vmatpush.bf16.msra.mxu0 %v1264
    %1276 = vmatpush.bf16.msra.mxu0 %v1263
    %1277 = vmatpush.bf16.msra.mxu0 %v1262
    %1278 = vmatpush.bf16.msra.mxu0 %v1261
    %1279 = vmatpush.bf16.msra.mxu0 %v1260
    %1280 = vmatpush.bf16.msra.mxu0 %v1259
    %1281 = vmatpush.bf16.msra.mxu0 %v1258
    %1282 = vmatmul.bf16.gmra.mxu0 %v1089
    %v1283 = vpop.f32.mrf.mxu0
    %v1284 = vadd.f32 %v1187, %v1283
    %v1285 = vpop.f32.mrf.mxu0
    %v1286 = vadd.f32 %v1189, %v1285
    %1287 = vmatmul.bf16.gmra.mxu0 %v1090
    %v1288 = vpop.f32.mrf.mxu0
    %v1289 = vadd.f32 %v1192, %v1288
    %v1290 = vpop.f32.mrf.mxu0
    %v1291 = vadd.f32 %v1194, %v1290
    %1292 = vmatmul.bf16.gmra.mxu0 %v1091
    %v1293 = vpop.f32.mrf.mxu0
    %v1294 = vadd.f32 %v1197, %v1293
    %v1295 = vpop.f32.mrf.mxu0
    %v1296 = vadd.f32 %v1199, %v1295
    %1297 = vmatmul.bf16.gmra.mxu0 %v1092
    %v1298 = vpop.f32.mrf.mxu0
    %v1299 = vadd.f32 %v1202, %v1298
    %v1300 = vpop.f32.mrf.mxu0
    %v1301 = vadd.f32 %v1204, %v1300
    %1302 = vmatmul.bf16.gmra.mxu0 %v1093
    %v1303 = vpop.f32.mrf.mxu0
    %v1304 = vadd.f32 %v1207, %v1303
    %v1305 = vpop.f32.mrf.mxu0
    %v1306 = vadd.f32 %v1209, %v1305
    %1307 = vmatmul.bf16.gmra.mxu0 %v1094
    %v1308 = vpop.f32.mrf.mxu0
    %v1309 = vadd.f32 %v1212, %v1308
    %v1310 = vpop.f32.mrf.mxu0
    %v1311 = vadd.f32 %v1214, %v1310
    %1312 = vmatmul.bf16.gmra.mxu0 %v1095
    %v1313 = vpop.f32.mrf.mxu0
    %v1314 = vadd.f32 %v1217, %v1313
    %v1315 = vpop.f32.mrf.mxu0
    %v1316 = vadd.f32 %v1219, %v1315
    %1317 = vmatmul.bf16.gmra.mxu0 %v1096
    %v1318 = vpop.f32.mrf.mxu0
    %v1319 = vadd.f32 %v1222, %v1318
    %v1320 = vpop.f32.mrf.mxu0
    %v1321 = vadd.f32 %v1224, %v1320
    %1322 = vdwg.mxu0
    %v1323 = vld [vmem:[%s7] sm:$0x1]
    %v1325 = vperm.slane %v1323, 0
    %v1327 = vadd.f32 %v1284, %v1325
    %v1328 = vadd.f32 %v1286, %v1325
    %v1329 = vadd.f32 %v1289, %v1325
    %v1330 = vadd.f32 %v1291, %v1325
    %v1331 = vadd.f32 %v1294, %v1325
    %v1332 = vadd.f32 %v1296, %v1325
    %v1333 = vadd.f32 %v1299, %v1325
    %v1334 = vadd.f32 %v1301, %v1325
    %v1335 = vadd.f32 %v1304, %v1325
    %v1336 = vadd.f32 %v1306, %v1325
    %v1337 = vadd.f32 %v1309, %v1325
    %v1338 = vadd.f32 %v1311, %v1325
    %v1339 = vadd.f32 %v1314, %v1325
    %v1340 = vadd.f32 %v1316, %v1325
    %v1341 = vadd.f32 %v1319, %v1325
    %v1342 = vadd.f32 %v1321, %v1325
    %v1343 = vmax.f32 %v1327, 0.0
    %v1344 = vmax.f32 %v1328, 0.0
    %v1345 = vmax.f32 %v1329, 0.0
    %v1346 = vmax.f32 %v1330, 0.0
    %v1347 = vmax.f32 %v1331, 0.0
    %v1348 = vmax.f32 %v1332, 0.0
    %v1349 = vmax.f32 %v1333, 0.0
    %v1350 = vmax.f32 %v1334, 0.0
    %v1351 = vmax.f32 %v1335, 0.0
    %v1352 = vmax.f32 %v1336, 0.0
    %v1353 = vmax.f32 %v1337, 0.0
    %v1354 = vmax.f32 %v1338, 0.0
    %v1355 = vmax.f32 %v1339, 0.0
    %v1356 = vmax.f32 %v1340, 0.0
    %v1357 = vmax.f32 %v1341, 0.0
    %v1358 = vmax.f32 %v1342, 0.0
    %v1359 = vpack.c.bf16 %v1344, %v1343
    %v1360 = vpack.c.bf16 %v1346, %v1345
    %v1361 = vpack.c.bf16 %v1348, %v1347
    %v1362 = vpack.c.bf16 %v1350, %v1349
    %v1363 = vpack.c.bf16 %v1352, %v1351
    %v1364 = vpack.c.bf16 %v1354, %v1353
    %v1365 = vpack.c.bf16 %v1356, %v1355
    %v1366 = vpack.c.bf16 %v1358, %v1357
    %v1367 = vld [vmem:[#allocation13] sm:$0xf]
    %v1368 = vld [vmem:[#allocation13 + $0x4] sm:$0xf]
    %v1369 = vld [vmem:[#allocation13 + $0x8] sm:$0xf]
    %v1370 = vld [vmem:[#allocation13 + $0xc] sm:$0xf]
    %v1371 = vld [vmem:[#allocation13 + $0x10] sm:$0xf]
    %v1372 = vld [vmem:[#allocation13 + $0x14] sm:$0xf]
    %v1373 = vld [vmem:[#allocation13 + $0x18] sm:$0xf]
    %v1374 = vld [vmem:[#allocation13 + $0x1c] sm:$0xf]
    %v1375 = vld [vmem:[#allocation13 + $0x20] sm:$0xf]
    %v1376 = vld [vmem:[#allocation13 + $0x24] sm:$0xf]
    %v1377 = vld [vmem:[#allocation13 + $0x28] sm:$0xf]
    %v1378 = vld [vmem:[#allocation13 + $0x2c] sm:$0xf]
    %v1379 = vld [vmem:[#allocation13 + $0x30] sm:$0xf]
    %v1380 = vld [vmem:[#allocation13 + $0x34] sm:$0xf]
    %v1381 = vld [vmem:[#allocation13 + $0x38] sm:$0xf]
    %v1382 = vld [vmem:[#allocation13 + $0x3c] sm:$0xf]
    %v1399 = vunpack.c.l.b16 %v1367
    %v1400 = vunpack.c.l.b16 %v1368
    %v1401 = vunpack.c.l.b16 %v1369
    %v1402 = vunpack.c.l.b16 %v1370
    %v1403 = vunpack.c.l.b16 %v1371
    %v1404 = vunpack.c.l.b16 %v1372
    %v1405 = vunpack.c.l.b16 %v1373
    %v1406 = vunpack.c.l.b16 %v1374
    %v1407 = vunpack.c.l.b16 %v1375
    %v1408 = vunpack.c.l.b16 %v1376
    %v1409 = vunpack.c.l.b16 %v1377
    %v1410 = vunpack.c.l.b16 %v1378
    %v1411 = vunpack.c.l.b16 %v1379
    %v1412 = vunpack.c.l.b16 %v1380
    %v1413 = vunpack.c.l.b16 %v1381
    %v1414 = vunpack.c.l.b16 %v1382
    %v1415 = vpack.c.b16 %v1400, %v1399
    %v1416 = vpack.c.b16 %v1402, %v1401
    %v1417 = vpack.c.b16 %v1404, %v1403
    %v1418 = vpack.c.b16 %v1406, %v1405
    %v1419 = vpack.c.b16 %v1408, %v1407
    %v1420 = vpack.c.b16 %v1410, %v1409
    %v1421 = vpack.c.b16 %v1412, %v1411
    %v1422 = vpack.c.b16 %v1414, %v1413
    %1431 = vmatpush.bf16.msra.mxu0 %v1422
    %1432 = vmatpush.bf16.msra.mxu0 %v1421
    %1433 = vmatpush.bf16.msra.mxu0 %v1420
    %1434 = vmatpush.bf16.msra.mxu0 %v1419
    %1435 = vmatpush.bf16.msra.mxu0 %v1418
    %1436 = vmatpush.bf16.msra.mxu0 %v1417
    %1437 = vmatpush.bf16.msra.mxu0 %v1416
    %1438 = vmatpush.bf16.msra.mxu0 %v1415
    %1439 = vmatmul.bf16.gmra.mxu0 %v1359
    %v1440 = vpop.f32.mrf.mxu0
    %v1441 = vadd.f32 0.0, %v1440
    %v1442 = vpop.f32.mrf.mxu0
    %v1443 = vadd.f32 0.0, %v1442
    %1444 = vmatmul.bf16.gmra.mxu0 %v1360
    %v1445 = vpop.f32.mrf.mxu0
    %v1446 = vadd.f32 0.0, %v1445
    %v1447 = vpop.f32.mrf.mxu0
    %v1448 = vadd.f32 0.0, %v1447
    %1449 = vmatmul.bf16.gmra.mxu0 %v1361
    %v1450 = vpop.f32.mrf.mxu0
    %v1451 = vadd.f32 0.0, %v1450
    %v1452 = vpop.f32.mrf.mxu0
    %v1453 = vadd.f32 0.0, %v1452
    %1454 = vmatmul.bf16.gmra.mxu0 %v1362
    %v1455 = vpop.f32.mrf.mxu0
    %v1456 = vadd.f32 0.0, %v1455
    %v1457 = vpop.f32.mrf.mxu0
    %v1458 = vadd.f32 0.0, %v1457
    %1459 = vmatmul.bf16.gmra.mxu0 %v1363
    %v1460 = vpop.f32.mrf.mxu0
    %v1461 = vadd.f32 0.0, %v1460
    %v1462 = vpop.f32.mrf.mxu0
    %v1463 = vadd.f32 0.0, %v1462
    %1464 = vmatmul.bf16.gmra.mxu0 %v1364
    %v1465 = vpop.f32.mrf.mxu0
    %v1466 = vadd.f32 0.0, %v1465
    %v1467 = vpop.f32.mrf.mxu0
    %v1468 = vadd.f32 0.0, %v1467
    %1469 = vmatmul.bf16.gmra.mxu0 %v1365
    %v1470 = vpop.f32.mrf.mxu0
    %v1471 = vadd.f32 0.0, %v1470
    %v1472 = vpop.f32.mrf.mxu0
    %v1473 = vadd.f32 0.0, %v1472
    %1474 = vmatmul.bf16.gmra.mxu0 %v1366
    %v1475 = vpop.f32.mrf.mxu0
    %v1476 = vadd.f32 0.0, %v1475
    %v1477 = vpop.f32.mrf.mxu0
    %v1478 = vadd.f32 0.0, %v1477
    %1479 = vdwg.mxu0
    %v1480 = vmul.f32 %v1441, %v466
    %v1481 = vmul.f32 %v1443, %v476
    %v1482 = vmul.f32 %v1446, %v486
    %v1483 = vmul.f32 %v1448, %v496
    %v1484 = vmul.f32 %v1451, %v506
    %v1485 = vmul.f32 %v1453, %v516
    %v1486 = vmul.f32 %v1456, %v526
    %v1487 = vmul.f32 %v1458, %v536
    %v1488 = vmul.f32 %v1461, %v546
    %v1489 = vmul.f32 %v1463, %v556
    %v1490 = vmul.f32 %v1466, %v566
    %v1491 = vmul.f32 %v1468, %v576
    %v1492 = vmul.f32 %v1471, %v586
    %v1493 = vmul.f32 %v1473, %v596
    %v1494 = vmul.f32 %v1476, %v606
    %v1495 = vmul.f32 %v1478, %v616
    %v1496 = vpack.c.bf16 %v1481, %v1480
    %v1497 = vpack.c.bf16 %v1483, %v1482
    %v1498 = vpack.c.bf16 %v1485, %v1484
    %v1499 = vpack.c.bf16 %v1487, %v1486
    %v1500 = vpack.c.bf16 %v1489, %v1488
    %v1501 = vpack.c.bf16 %v1491, %v1490
    %v1502 = vpack.c.bf16 %v1493, %v1492
    %v1503 = vpack.c.bf16 %v1495, %v1494
    %v1504 = vunpack.c.l.bf16 %v1496
    %v1505 = vunpack.c.h.bf16 %v1496
    %v1506 = vunpack.c.l.bf16 %v1497
    %v1507 = vunpack.c.h.bf16 %v1497
    %v1508 = vunpack.c.l.bf16 %v1498
    %v1509 = vunpack.c.h.bf16 %v1498
    %v1510 = vunpack.c.l.bf16 %v1499
    %v1511 = vunpack.c.h.bf16 %v1499
    %v1512 = vunpack.c.l.bf16 %v1500
    %v1513 = vunpack.c.h.bf16 %v1500
    %v1514 = vunpack.c.l.bf16 %v1501
    %v1515 = vunpack.c.h.bf16 %v1501
    %v1516 = vunpack.c.l.bf16 %v1502
    %v1517 = vunpack.c.h.bf16 %v1502
    %v1518 = vunpack.c.l.bf16 %v1503
    %v1519 = vunpack.c.h.bf16 %v1503
    %1520 = vmatpush.bf16.msra.mxu0 %v1503
    %1521 = vmatpush.bf16.msra.mxu0 %v1502
    %1522 = vmatpush.bf16.msra.mxu0 %v1501
    %1523 = vmatpush.bf16.msra.mxu0 %v1500
    %1524 = vmatpush.bf16.msra.mxu0 %v1499
    %1525 = vmatpush.bf16.msra.mxu0 %v1498
    %1526 = vmatpush.bf16.msra.mxu0 %v1497
    %1527 = vmatpush.bf16.msra.mxu0 %v1496
    %1528 = vmatmul.bf16.gmra.mxu0 %v161
    %v1529 = vpop.f32.mrf.mxu0
    %v1530 = vadd.f32 %v1504, %v1529
    %v1531 = vpop.f32.mrf.mxu0
    %v1532 = vadd.f32 %v1505, %v1531
    %1533 = vmatmul.bf16.gmra.mxu0 %v162
    %v1534 = vpop.f32.mrf.mxu0
    %v1535 = vadd.f32 %v1506, %v1534
    %v1536 = vpop.f32.mrf.mxu0
    %v1537 = vadd.f32 %v1507, %v1536
    %1538 = vmatmul.bf16.gmra.mxu0 %v163
    %v1539 = vpop.f32.mrf.mxu0
    %v1540 = vadd.f32 %v1508, %v1539
    %v1541 = vpop.f32.mrf.mxu0
    %v1542 = vadd.f32 %v1509, %v1541
    %1543 = vmatmul.bf16.gmra.mxu0 %v164
    %v1544 = vpop.f32.mrf.mxu0
    %v1545 = vadd.f32 %v1510, %v1544
    %v1546 = vpop.f32.mrf.mxu0
    %v1547 = vadd.f32 %v1511, %v1546
    %1548 = vmatmul.bf16.gmra.mxu0 %v165
    %v1549 = vpop.f32.mrf.mxu0
    %v1550 = vadd.f32 %v1512, %v1549
    %v1551 = vpop.f32.mrf.mxu0
    %v1552 = vadd.f32 %v1513, %v1551
    %1553 = vmatmul.bf16.gmra.mxu0 %v166
    %v1554 = vpop.f32.mrf.mxu0
    %v1555 = vadd.f32 %v1514, %v1554
    %v1556 = vpop.f32.mrf.mxu0
    %v1557 = vadd.f32 %v1515, %v1556
    %1558 = vmatmul.bf16.gmra.mxu0 %v167
    %v1559 = vpop.f32.mrf.mxu0
    %v1560 = vadd.f32 %v1516, %v1559
    %v1561 = vpop.f32.mrf.mxu0
    %v1562 = vadd.f32 %v1517, %v1561
    %1563 = vmatmul.bf16.gmra.mxu0 %v168
    %v1564 = vpop.f32.mrf.mxu0
    %v1565 = vadd.f32 %v1518, %v1564
    %v1566 = vpop.f32.mrf.mxu0
    %v1567 = vadd.f32 %v1519, %v1566
    %1568 = vdwg.mxu0
    %v1569 = vmul.f32 %v1530, %v466
    %v1570 = vmul.f32 %v1532, %v476
    %v1571 = vmul.f32 %v1535, %v486
    %v1572 = vmul.f32 %v1537, %v496
    %v1573 = vmul.f32 %v1540, %v506
    %v1574 = vmul.f32 %v1542, %v516
    %v1575 = vmul.f32 %v1545, %v526
    %v1576 = vmul.f32 %v1547, %v536
    %v1577 = vmul.f32 %v1550, %v546
    %v1578 = vmul.f32 %v1552, %v556
    %v1579 = vmul.f32 %v1555, %v566
    %v1580 = vmul.f32 %v1557, %v576
    %v1581 = vmul.f32 %v1560, %v586
    %v1582 = vmul.f32 %v1562, %v596
    %v1583 = vmul.f32 %v1565, %v606
    %v1584 = vmul.f32 %v1567, %v616
    %v1585 = vld [vmem:[%s9] sm:$0x1]
    %v1587 = vperm.slane %v1585, 0
    %v1589 = vadd.f32 %v1569, %v1587
    %v1590 = vadd.f32 %v1570, %v1587
    %v1591 = vadd.f32 %v1571, %v1587
    %v1592 = vadd.f32 %v1572, %v1587
    %v1593 = vadd.f32 %v1573, %v1587
    %v1594 = vadd.f32 %v1574, %v1587
    %v1595 = vadd.f32 %v1575, %v1587
    %v1596 = vadd.f32 %v1576, %v1587
    %v1597 = vadd.f32 %v1577, %v1587
    %v1598 = vadd.f32 %v1578, %v1587
    %v1599 = vadd.f32 %v1579, %v1587
    %v1600 = vadd.f32 %v1580, %v1587
    %v1601 = vadd.f32 %v1581, %v1587
    %v1602 = vadd.f32 %v1582, %v1587
    %v1603 = vadd.f32 %v1583, %v1587
    %v1604 = vadd.f32 %v1584, %v1587
    %v1605 = vlaneseq
    %v1606 = vand.u32 %v1605, 127
    %vm1607 = vcmp.lt.s32.totalorder %v1606, 8
    %v1608 = vsel %vm1607, %v1589, -1e+30
    %v1609 = vsel %vm1607, %v1590, -1e+30
    %v1610 = vsel %vm1607, %v1591, -1e+30
    %v1611 = vsel %vm1607, %v1592, -1e+30
    %v1612 = vsel %vm1607, %v1593, -1e+30
    %v1613 = vsel %vm1607, %v1594, -1e+30
    %v1614 = vsel %vm1607, %v1595, -1e+30
    %v1615 = vsel %vm1607, %v1596, -1e+30
    %v1616 = vsel %vm1607, %v1597, -1e+30
    %v1617 = vsel %vm1607, %v1598, -1e+30
    %v1618 = vsel %vm1607, %v1599, -1e+30
    %v1619 = vsel %vm1607, %v1600, -1e+30
    %v1620 = vsel %vm1607, %v1601, -1e+30
    %v1621 = vsel %vm1607, %v1602, -1e+30
    %v1622 = vsel %vm1607, %v1603, -1e+30
    %v1623 = vsel %vm1607, %v1604, -1e+30
    %1624 = vmax.xlane.f32.xlu0 %v1608
    %v1625 = vpop.xlane.xlu0 %1624
    %1626 = vmax.xlane.f32.xlu0 %v1609
    %v1627 = vpop.xlane.xlu0 %1626
    %1628 = vmax.xlane.f32.xlu0 %v1610
    %v1629 = vpop.xlane.xlu0 %1628
    %1630 = vmax.xlane.f32.xlu0 %v1611
    %v1631 = vpop.xlane.xlu0 %1630
    %1632 = vmax.xlane.f32.xlu0 %v1612
    %v1633 = vpop.xlane.xlu0 %1632
    %1634 = vmax.xlane.f32.xlu0 %v1613
    %v1635 = vpop.xlane.xlu0 %1634
    %1636 = vmax.xlane.f32.xlu0 %v1614
    %v1637 = vpop.xlane.xlu0 %1636
    %1638 = vmax.xlane.f32.xlu0 %v1615
    %v1639 = vpop.xlane.xlu0 %1638
    %1640 = vmax.xlane.f32.xlu0 %v1616
    %v1641 = vpop.xlane.xlu0 %1640
    %1642 = vmax.xlane.f32.xlu0 %v1617
    %v1643 = vpop.xlane.xlu0 %1642
    %1644 = vmax.xlane.f32.xlu0 %v1618
    %v1645 = vpop.xlane.xlu0 %1644
    %1646 = vmax.xlane.f32.xlu0 %v1619
    %v1647 = vpop.xlane.xlu0 %1646
    %1648 = vmax.xlane.f32.xlu0 %v1620
    %v1649 = vpop.xlane.xlu0 %1648
    %1650 = vmax.xlane.f32.xlu0 %v1621
    %v1651 = vpop.xlane.xlu0 %1650
    %1652 = vmax.xlane.f32.xlu0 %v1622
    %v1653 = vpop.xlane.xlu0 %1652
    %1654 = vmax.xlane.f32.xlu0 %v1623
    %v1655 = vpop.xlane.xlu0 %1654
    %v1656 = vsub.f32 %v1608, %v1625
    %v1657 = vsub.f32 %v1609, %v1627
    %v1658 = vsub.f32 %v1610, %v1629
    %v1659 = vsub.f32 %v1611, %v1631
    %v1660 = vsub.f32 %v1612, %v1633
    %v1661 = vsub.f32 %v1613, %v1635
    %v1662 = vsub.f32 %v1614, %v1637
    %v1663 = vsub.f32 %v1615, %v1639
    %v1664 = vsub.f32 %v1616, %v1641
    %v1665 = vsub.f32 %v1617, %v1643
    %v1666 = vsub.f32 %v1618, %v1645
    %v1667 = vsub.f32 %v1619, %v1647
    %v1668 = vsub.f32 %v1620, %v1649
    %v1669 = vsub.f32 %v1621, %v1651
    %v1670 = vsub.f32 %v1622, %v1653
    %v1671 = vsub.f32 %v1623, %v1655
    %v1672 = vmul.f32 %v1656, 1.442695
    %v1673 = vpow.pop %v1672
    %v1674 = vmul.f32 %v1657, 1.442695
    %v1675 = vpow.pop %v1674
    %v1676 = vmul.f32 %v1658, 1.442695
    %v1677 = vpow.pop %v1676
    %v1678 = vmul.f32 %v1659, 1.442695
    %v1679 = vpow.pop %v1678
    %v1680 = vmul.f32 %v1660, 1.442695
    %v1681 = vpow.pop %v1680
    %v1682 = vmul.f32 %v1661, 1.442695
    %v1683 = vpow.pop %v1682
    %v1684 = vmul.f32 %v1662, 1.442695
    %v1685 = vpow.pop %v1684
    %v1686 = vmul.f32 %v1663, 1.442695
    %v1687 = vpow.pop %v1686
    %v1688 = vmul.f32 %v1664, 1.442695
    %v1689 = vpow.pop %v1688
    %v1690 = vmul.f32 %v1665, 1.442695
    %v1691 = vpow.pop %v1690
    %v1692 = vmul.f32 %v1666, 1.442695
    %v1693 = vpow.pop %v1692
    %v1694 = vmul.f32 %v1667, 1.442695
    %v1695 = vpow.pop %v1694
    %v1696 = vmul.f32 %v1668, 1.442695
    %v1697 = vpow.pop %v1696
    %v1698 = vmul.f32 %v1669, 1.442695
    %v1699 = vpow.pop %v1698
    %v1700 = vmul.f32 %v1670, 1.442695
    %v1701 = vpow.pop %v1700
    %v1702 = vmul.f32 %v1671, 1.442695
    %v1703 = vpow.pop %v1702
    %1704 = vadd.xlane.f32.xlu0 %v1673
    %v1705 = vpop.xlane.xlu0 %1704
    %1706 = vadd.xlane.f32.xlu0 %v1675
    %v1707 = vpop.xlane.xlu0 %1706
    %1708 = vadd.xlane.f32.xlu0 %v1677
    %v1709 = vpop.xlane.xlu0 %1708
    %1710 = vadd.xlane.f32.xlu0 %v1679
    %v1711 = vpop.xlane.xlu0 %1710
    %1712 = vadd.xlane.f32.xlu0 %v1681
    %v1713 = vpop.xlane.xlu0 %1712
    %1714 = vadd.xlane.f32.xlu0 %v1683
    %v1715 = vpop.xlane.xlu0 %1714
    %1716 = vadd.xlane.f32.xlu0 %v1685
    %v1717 = vpop.xlane.xlu0 %1716
    %1718 = vadd.xlane.f32.xlu0 %v1687
    %v1719 = vpop.xlane.xlu0 %1718
    %1720 = vadd.xlane.f32.xlu0 %v1689
    %v1721 = vpop.xlane.xlu0 %1720
    %1722 = vadd.xlane.f32.xlu0 %v1691
    %v1723 = vpop.xlane.xlu0 %1722
    %1724 = vadd.xlane.f32.xlu0 %v1693
    %v1725 = vpop.xlane.xlu0 %1724
    %1726 = vadd.xlane.f32.xlu0 %v1695
    %v1727 = vpop.xlane.xlu0 %1726
    %1728 = vadd.xlane.f32.xlu0 %v1697
    %v1729 = vpop.xlane.xlu0 %1728
    %1730 = vadd.xlane.f32.xlu0 %v1699
    %v1731 = vpop.xlane.xlu0 %1730
    %1732 = vadd.xlane.f32.xlu0 %v1701
    %v1733 = vpop.xlane.xlu0 %1732
    %1734 = vadd.xlane.f32.xlu0 %v1703
    %v1735 = vpop.xlane.xlu0 %1734
    %v1736 = vlog2.pop %v1705
    %v1737 = vmul.f32 %v1736, 0.6931472
    %v1738 = vlog2.pop %v1707
    %v1739 = vmul.f32 %v1738, 0.6931472
    %v1740 = vlog2.pop %v1709
    %v1741 = vmul.f32 %v1740, 0.6931472
    %v1742 = vlog2.pop %v1711
    %v1743 = vmul.f32 %v1742, 0.6931472
    %v1744 = vlog2.pop %v1713
    %v1745 = vmul.f32 %v1744, 0.6931472
    %v1746 = vlog2.pop %v1715
    %v1747 = vmul.f32 %v1746, 0.6931472
    %v1748 = vlog2.pop %v1717
    %v1749 = vmul.f32 %v1748, 0.6931472
    %v1750 = vlog2.pop %v1719
    %v1751 = vmul.f32 %v1750, 0.6931472
    %v1752 = vlog2.pop %v1721
    %v1753 = vmul.f32 %v1752, 0.6931472
    %v1754 = vlog2.pop %v1723
    %v1755 = vmul.f32 %v1754, 0.6931472
    %v1756 = vlog2.pop %v1725
    %v1757 = vmul.f32 %v1756, 0.6931472
    %v1758 = vlog2.pop %v1727
    %v1759 = vmul.f32 %v1758, 0.6931472
    %v1760 = vlog2.pop %v1729
    %v1761 = vmul.f32 %v1760, 0.6931472
    %v1762 = vlog2.pop %v1731
    %v1763 = vmul.f32 %v1762, 0.6931472
    %v1764 = vlog2.pop %v1733
    %v1765 = vmul.f32 %v1764, 0.6931472
    %v1766 = vlog2.pop %v1735
    %v1767 = vmul.f32 %v1766, 0.6931472
    %v1768 = vsub.f32 %v1656, %v1737
    %v1769 = vsub.f32 %v1657, %v1739
    %v1770 = vsub.f32 %v1658, %v1741
    %v1771 = vsub.f32 %v1659, %v1743
    %v1772 = vsub.f32 %v1660, %v1745
    %v1773 = vsub.f32 %v1661, %v1747
    %v1774 = vsub.f32 %v1662, %v1749
    %v1775 = vsub.f32 %v1663, %v1751
    %v1776 = vsub.f32 %v1664, %v1753
    %v1777 = vsub.f32 %v1665, %v1755
    %v1778 = vsub.f32 %v1666, %v1757
    %v1779 = vsub.f32 %v1667, %v1759
    %v1780 = vsub.f32 %v1668, %v1761
    %v1781 = vsub.f32 %v1669, %v1763
    %v1782 = vsub.f32 %v1670, %v1765
    %v1783 = vsub.f32 %v1671, %v1767
    %1784 = vst [vmem:[#allocation14] sm:$0xff] %v1768
    %1785 = vst [vmem:[#allocation14 + $0x8] sm:$0xff] %v1769
    %1786 = vst [vmem:[#allocation14 + $0x10] sm:$0xff] %v1770
    %1787 = vst [vmem:[#allocation14 + $0x18] sm:$0xff] %v1771
    %1788 = vst [vmem:[#allocation14 + $0x20] sm:$0xff] %v1772
    %1789 = vst [vmem:[#allocation14 + $0x28] sm:$0xff] %v1773
    %1790 = vst [vmem:[#allocation14 + $0x30] sm:$0xff] %v1774
    %1791 = vst [vmem:[#allocation14 + $0x38] sm:$0xff] %v1775
    %1792 = vst [vmem:[#allocation14 + $0x40] sm:$0xff] %v1776
    %1793 = vst [vmem:[#allocation14 + $0x48] sm:$0xff] %v1777
    %1794 = vst [vmem:[#allocation14 + $0x50] sm:$0xff] %v1778
    %1795 = vst [vmem:[#allocation14 + $0x58] sm:$0xff] %v1779
    %1796 = vst [vmem:[#allocation14 + $0x60] sm:$0xff] %v1780
    %1797 = vst [vmem:[#allocation14 + $0x68] sm:$0xff] %v1781
    %1798 = vst [vmem:[#allocation14 + $0x70] sm:$0xff] %v1782
    %1799 = vst [vmem:[#allocation14 + $0x78] sm:$0xff] %v1783
    // Predicated region
    $region70: #{tpu_custom_call.1} parent=1 // pred_check
      _
    $region71: #{tpu_custom_call.1} parent=1 // pred_check_branch
      %1801 = sbr.rel (0) target = $region73
    $region72: #{tpu_custom_call.1} parent=1 // pred_region
      %1803 = vsyncadd [#allocation4], 0
      %s1804 = sshll.u32 [#allocation14], 4
      %s1805 = int_to_ptr.vmem [resolvable:$true] %s1804
      %s1806 = sshll.u32 %s10, 4
      %s1807 = int_to_ptr.hbm [resolvable:$true] %s1806
      %1812 = dma.vmem_to_hbm [thread:$0]  %s1805, 2048, %s1807, [#allocation4], 128, 128, 8
    $region73: #{tpu_custom_call.1} parent=1 // pred_fallthru
      _
    // Predicated region
    $region74: #{tpu_custom_call.1} parent=1 // pred_check
      _
    $region75: #{tpu_custom_call.1} parent=1 // pred_check_branch
      %1814 = sbr.rel (0) target = $region77
    $region76: #{tpu_custom_call.1} parent=1 // pred_region
      %1816 = dma.done [#allocation4], 2048
    $region77: #{tpu_custom_call.1} parent=1 // pred_fallthru
      _
    %1817 = vsyncpa [#allocation3], 1
    %1818 = vsyncpa [#allocation6], 1
    %1819 = vsyncpa [#allocation9], 1
    %1820 = vsyncpa [#allocation12], 1
    %1821 = vsyncpa [#allocation4], 1

</llo_original>
